<compile_context>
chip_gen: v6e
topology: v6e:2x2x1
jax: 0.10.0
libtpu: 0.0.40
codegen_flags: <defaults>
</compile_context>

<pallas_src>
import functools

import jax
import jax.numpy as jnp
from jax import lax
from jax.experimental import pallas as pl
from jax.experimental.pallas import tpu as pltpu


_VMEM = pl.BlockSpec(memory_space=pltpu.MemorySpace.VMEM)


# ----------------------------------------------------------------------------
# Fused Pallas kernel
# ----------------------------------------------------------------------------
def _gru_unrolled(x_all, h0, wih_ref, whh_ref, gib_ref, bhhn_ref,
                  *, seq_len, batch, d, store_ref=None):
    """Single-layer GRU (PyTorch gate order r, z, n), fully unrolled over time.

    x_all:    [seq_len*batch, d]  time-major inputs (row = t*batch + b)
    h0:       [batch, d]          initial hidden state (vregs)
    wih_ref:  [d, 3d]  lane-stacked (r|z|n), pre-transposed: x @ wih == x @ W_ih.T
    whh_ref:  [d, 3d]  lane-stacked (r|z|n), pre-transposed
    gib_ref:  [1, 3d]  b_ih with b_hh_r / b_hh_z folded in (n slot = b_in only)
    bhhn_ref: [1, d]   b_hh of the n gate (must stay inside r * (...))
    store_ref: optional VMEM ref [batch*seq_len, d]; hidden states are written
               BATCH-major (row = b*seq_len + t) so the caller can emit a
               batch-first output without a trailing transpose.
    Returns the final hidden state [batch, d].
    """
    # Hoisted input projection: ONE matmul covering all timesteps and all three
    # gates (off the serial critical path).  r/z hidden biases are pre-folded.
    gi = jnp.dot(x_all, wih_ref[...], preferred_element_type=jnp.float32) + gib_ref[...]
    whh = whh_ref[...]
    bhh_n = bhhn_ref[...]

    h = h0
    # TODO(synk): for long sequences, replace this static unroll with a
    # lax.fori_loop / time-chunked "arbitrary" grid axis (gi chunk in scratch).
    for t in range(seq_len):
        gi_t = gi[t * batch:(t + 1) * batch, :]                     # [batch, 3d]
        gh = jnp.dot(h, whh, preferred_element_type=jnp.float32)    # ONE matmul/step
        rz = jax.nn.sigmoid(gi_t[:, :2 * d] + gh[:, :2 * d])
        r = rz[:, :d]
        z = rz[:, d:]
        n = jnp.tanh(gi_t[:, 2 * d:] + r * (gh[:, 2 * d:] + bhh_n))
        h = (1.0 - z) * n + z * h
        if store_ref is not None:
            for b in range(batch):                                   # batch-major rows
                store_ref[pl.ds(b * seq_len + t, 1), :] = h[b:b + 1, :]
    return h


def seq2seq_kernel(enc_x_ref, dec_x_ref,
                   enc_wih_ref, enc_whh_ref, enc_gib_ref, enc_bhhn_ref,
                   dec_wih_ref, dec_whh_ref, dec_gib_ref, dec_bhhn_ref,
                   out_w_ref, out_b_ref,
                   out_ref, dec_hs_ref,
                   *, s_in, s_out, batch, d):
    # ---- Encoder: only its final hidden state is consumed downstream ----
    h0 = jnp.zeros((batch, d), jnp.float32)
    enc_last = _gru_unrolled(enc_x_ref[...], h0,
                             enc_wih_ref, enc_whh_ref, enc_gib_ref, enc_bhhn_ref,
                             seq_len=s_in, batch=batch, d=d)

    # ---- Decoder: seeded with encoder last hidden; states stored batch-major ----
    _gru_unrolled(dec_x_ref[...], enc_last,
                  dec_wih_ref, dec_whh_ref, dec_gib_ref, dec_bhhn_ref,
                  seq_len=s_out, batch=batch, d=d, store_ref=dec_hs_ref)

    # ---- Vocab projection + EXACT softmax, written batch-first ----
    dec_h = dec_hs_ref[...]                                          # [batch*s_out, d]
    logits = jnp.dot(dec_h, out_w_ref[...],
                     preferred_element_type=jnp.float32) + out_b_ref[...]
    m = jnp.max(logits, axis=-1, keepdims=True)
    e = jnp.exp(logits - m)
    denom = jnp.sum(e, axis=-1, keepdims=True)
    probs = e / denom                      # exact normalization: rows sum to 1
    out_ref[...] = probs.reshape(batch, s_out, -1)


# ----------------------------------------------------------------------------
# Wrappers
# ----------------------------------------------------------------------------
def prepare_params(params):
    """One-time repack of PyTorch-layout weights into the fused-kernel layout."""
    d = params["enc_embed"].shape[1]

    def pack_gru(w_ih, w_hh, b_ih, b_hh):
        # [3d, d] gate-stacked rows  ->  [d, 3d] lane-stacked columns (r|z|n),
        # pre-transposed so x @ w == x @ W.T with all gates in one matmul.
        wih = w_ih.T
        whh = w_hh.T
        # Fold b_hh_r and b_hh_z into the hoisted input-projection bias;
        # b_hh_n must remain inside r * (W_hn h + b_hn).
        gib = jnp.concatenate([b_ih[:2 * d] + b_hh[:2 * d],
                               b_ih[2 * d:]]).reshape(1, 3 * d)
        bhhn = b_hh[2 * d:].reshape(1, d)
        return wih, whh, gib, bhhn

    enc = pack_gru(params["enc_w_ih"], params["enc_w_hh"],
                   params["enc_b_ih"], params["enc_b_hh"])
    dec = pack_gru(params["dec_w_ih"], params["dec_w_hh"],
                   params["dec_b_ih"], params["dec_b_hh"])
    return {
        "enc_embed": params["enc_embed"],
        "dec_embed": params["dec_embed"],
        "enc_w_ih": enc[0], "enc_w_hh": enc[1], "enc_gib": enc[2], "enc_bhhn": enc[3],
        "dec_w_ih": dec[0], "dec_w_hh": dec[1], "dec_gib": dec[2], "dec_bhhn": dec[3],
        "out_w": params["out_w"].T,                  # [D, V]
        "out_b": params["out_b"].reshape(1, -1),     # [1, V]
    }


def model_forward(prep, input_indices, output_indices, answer_indices=None):
    """Mirrors Model.forward (answer_indices accepted but unused, as in the
    original Encoder.forward). Returns [B, S_out, V] softmax probabilities."""
    b, s_in = input_indices.shape
    _, s_out = output_indices.shape
    d = prep["enc_embed"].shape[1]
    v = prep["out_w"].shape[1]

    # Embedding gathers stay as (tiny) XLA gathers feeding the fused kernel.
    enc_x = jnp.take(prep["enc_embed"], input_indices.T.reshape(-1), axis=0)   # [S_in*B, D]
    dec_x = jnp.take(prep["dec_embed"], output_indices.T.reshape(-1), axis=0)  # [S_out*B, D]

    kernel = functools.partial(seq2seq_kernel, s_in=s_in, s_out=s_out, batch=b, d=d)
    # NOTE: at B=2, S=8, D=32, V=64 everything fits whole-in-VMEM on v5e/v6e/v7x.
    # TODO(synk): for large S / V add a time-chunk grid axis and tile the vocab
    # (online softmax) so the design scales on v7x's 64 MiB VMEM.
    return pl.pallas_call(
        kernel,
        out_shape=jax.ShapeDtypeStruct((b, s_out, v), jnp.float32),
        in_specs=[_VMEM] * 12,
        out_specs=_VMEM,
        scratch_shapes=[pltpu.VMEM((b * s_out, d), jnp.float32)],
        compiler_params=pltpu.CompilerParams(vmem_limit_bytes=32 * 1024 * 1024),
    )(enc_x, dec_x,
      prep["enc_w_ih"], prep["enc_w_hh"], prep["enc_gib"], prep["enc_bhhn"],
      prep["dec_w_ih"], prep["dec_w_hh"], prep["dec_gib"], prep["dec_bhhn"],
      prep["out_w"], prep["out_b"])


# ----------------------------------------------------------------------------
# Pure-JAX reference (numerical sanity check, PyTorch-layout weights)
# ----------------------------------------------------------------------------
def _ref_gru(x_bsd, h0, w_ih, w_hh, b_ih, b_hh):
    d = h0.shape[-1]

    def step(h, x_t):
        gi = x_t @ w_ih.T + b_ih
        gh = h @ w_hh.T + b_hh
        r = jax.nn.sigmoid(gi[:, :d] + gh[:, :d])
        z = jax.nn.sigmoid(gi[:, d:2 * d] + gh[:, d:2 * d])
        n = jnp.tanh(gi[:, 2 * d:] + r * gh[:, 2 * d:])
        h_new = (1 - z) * n + z * h
        return h_new, h_new

    _, hs = lax.scan(step, h0, jnp.transpose(x_bsd, (1, 0, 2)))
    return jnp.transpose(hs, (1, 0, 2))


def _ref_forward(params, input_indices, output_indices):
    enc_emb = jnp.take(params["enc_embed"], input_indices, axis=0)
    b, _, d = enc_emb.shape
    enc_h = _ref_gru(enc_emb, jnp.zeros((b, d), jnp.float32),
                     params["enc_w_ih"], params["enc_w_hh"],
                     params["enc_b_ih"], params["enc_b_hh"])
    dec_emb = jnp.take(params["dec_embed"], output_indices, axis=0)
    dec_h = _ref_gru(dec_emb, enc_h[:, -1, :],
                     params["dec_w_ih"], params["dec_w_hh"],
                     params["dec_b_ih"], params["dec_b_hh"])
    logits = dec_h @ params["out_w"].T + params["out_b"]
    return jax.nn.softmax(logits, axis=-1)


# ----------------------------------------------------------------------------
# Deterministic parameter construction (PyTorch layout)
# ----------------------------------------------------------------------------
def init_params(key, vocab_size, d_model):
    ks = jax.random.split(key, 12)
    bound = 1.0 / jnp.sqrt(d_model)
    u = lambda k, shape: jax.random.uniform(k, shape, jnp.float32, -bound, bound)
    return {
        "enc_embed": jax.random.normal(ks[0], (vocab_size, d_model), jnp.float32) * 0.1,
        "enc_w_ih": u(ks[1], (3 * d_model, d_model)),
        "enc_w_hh": u(ks[2], (3 * d_model, d_model)),
        "enc_b_ih": u(ks[3], (3 * d_model,)),
        "enc_b_hh": u(ks[4], (3 * d_model,)),
        "dec_embed": jax.random.normal(ks[5], (vocab_size, d_model), jnp.float32) * 0.1,
        "dec_w_ih": u(ks[6], (3 * d_model, d_model)),
        "dec_w_hh": u(ks[7], (3 * d_model, d_model)),
        "dec_b_ih": u(ks[8], (3 * d_model,)),
        "dec_b_hh": u(ks[9], (3 * d_model,)),
        "out_w": u(ks[10], (vocab_size, d_model)),
        "out_b": u(ks[11], (vocab_size,)),
    }


if __name__ == "__main__":
    batch_size = 2
    input_seq_len = 8
    output_seq_len = 8
    d_model = 32
    vocab_size = 64

    key = jax.random.PRNGKey(0)
    k_param, k_in, k_out = jax.random.split(key, 3)

    params = init_params(k_param, vocab_size, d_model)
    prep = prepare_params(params)   # one-time weight repack (not per forward call)
    input_indices = jax.random.randint(k_in, (batch_size, input_seq_len), 0, vocab_size)
    output_indices = jax.random.randint(k_out, (batch_size, output_seq_len), 0, vocab_size)

    fwd = jax.jit(model_forward)
    out = fwd(prep, input_indices, output_indices)
    out = jax.block_until_ready(out)

    assert out.shape == (batch_size, output_seq_len, vocab_size)
    ref = _ref_forward(params, input_indices, output_indices)
    assert jnp.allclose(out, ref, atol=2e-3), "Pallas output mismatch vs reference"
    # probabilities must sum to 1 along the vocab axis (exact softmax divide)
    assert jnp.allclose(jnp.sum(out, axis=-1), 1.0, atol=2e-3)

    print("KERNEL_OK")
</pallas_src>

<mosaic_0001>
module attributes {stable_mosaic.version = 11 : i64} {
  func.func @seq2seq_kernel(%arg0: memref<16x32xf32, #tpu.memory_space<vmem>>, %arg1: memref<16x32xf32, #tpu.memory_space<vmem>>, %arg2: memref<32x96xf32, #tpu.memory_space<vmem>>, %arg3: memref<32x96xf32, #tpu.memory_space<vmem>>, %arg4: memref<1x96xf32, #tpu.memory_space<vmem>>, %arg5: memref<1x32xf32, #tpu.memory_space<vmem>>, %arg6: memref<32x96xf32, #tpu.memory_space<vmem>>, %arg7: memref<32x96xf32, #tpu.memory_space<vmem>>, %arg8: memref<1x96xf32, #tpu.memory_space<vmem>>, %arg9: memref<1x32xf32, #tpu.memory_space<vmem>>, %arg10: memref<32x64xf32, #tpu.memory_space<vmem>>, %arg11: memref<1x64xf32, #tpu.memory_space<vmem>>, %arg12: memref<2x8x64xf32, #tpu.memory_space<vmem>>, %arg13: memref<16x32xf32, #tpu.memory_space<vmem>>) attributes {dimension_semantics = [], scalar_prefetch = 0 : i64, scratch_operands = 1 : i64, tpu.core_type = #tpu.core_type<tc>} {
    %cst = arith.constant 0.000000e+00 : f32
    %0 = vector.broadcast %cst : f32 to vector<2x32xf32>
    %c0 = arith.constant 0 : index
    %c0_0 = arith.constant 0 : index
    %1 = vector.load %arg0[%c0, %c0_0] : memref<16x32xf32, #tpu.memory_space<vmem>>, vector<16x32xf32>
    %c0_1 = arith.constant 0 : index
    %c0_2 = arith.constant 0 : index
    %2 = vector.load %arg2[%c0_1, %c0_2] : memref<32x96xf32, #tpu.memory_space<vmem>>, vector<32x96xf32>
    %cst_3 = arith.constant dense<0.000000e+00> : vector<16x96xf32>
    %3 = tpu.matmul %1, %2, %cst_3 {dimension_numbers = #tpu.dot_dimension_numbers<[1], [0], [0], [1], [0, 0, 1, 1], [], []>} : vector<16x32xf32>, vector<32x96xf32>, vector<16x96xf32> -> vector<16x96xf32>
    %c0_4 = arith.constant 0 : index
    %c0_5 = arith.constant 0 : index
    %4 = vector.load %arg4[%c0_4, %c0_5] : memref<1x96xf32, #tpu.memory_space<vmem>>, vector<1x96xf32>
    %5 = vector.broadcast %4 : vector<1x96xf32> to vector<16x96xf32>
    %6 = arith.addf %3, %5 : vector<16x96xf32>
    %c0_6 = arith.constant 0 : index
    %c0_7 = arith.constant 0 : index
    %7 = vector.load %arg3[%c0_6, %c0_7] : memref<32x96xf32, #tpu.memory_space<vmem>>, vector<32x96xf32>
    %c0_8 = arith.constant 0 : index
    %c0_9 = arith.constant 0 : index
    %8 = vector.load %arg5[%c0_8, %c0_9] : memref<1x32xf32, #tpu.memory_space<vmem>>, vector<1x32xf32>
    %9 = vector.extract_strided_slice %6 {offsets = [0, 0], sizes = [2, 96], strides = [1, 1]} : vector<16x96xf32> to vector<2x96xf32>
    %cst_10 = arith.constant dense<0.000000e+00> : vector<2x96xf32>
    %10 = tpu.matmul %0, %7, %cst_10 {dimension_numbers = #tpu.dot_dimension_numbers<[1], [0], [0], [1], [0, 0, 1, 1], [], []>} : vector<2x32xf32>, vector<32x96xf32>, vector<2x96xf32> -> vector<2x96xf32>
    %11 = vector.extract_strided_slice %9 {offsets = [0, 0], sizes = [2, 64], strides = [1, 1]} : vector<2x96xf32> to vector<2x64xf32>
    %12 = vector.extract_strided_slice %10 {offsets = [0, 0], sizes = [2, 64], strides = [1, 1]} : vector<2x96xf32> to vector<2x64xf32>
    %13 = arith.addf %11, %12 : vector<2x64xf32>
    %14 = arith.negf %13 : vector<2x64xf32>
    %15 = math.exp %14 : vector<2x64xf32>
    %cst_11 = arith.constant 1.000000e+00 : f32
    %16 = vector.broadcast %cst_11 : f32 to vector<2x64xf32>
    %17 = arith.addf %16, %15 : vector<2x64xf32>
    %18 = arith.divf %16, %17 : vector<2x64xf32>
    %19 = vector.extract_strided_slice %18 {offsets = [0, 0], sizes = [2, 32], strides = [1, 1]} : vector<2x64xf32> to vector<2x32xf32>
    %20 = vector.extract_strided_slice %18 {offsets = [0, 32], sizes = [2, 32], strides = [1, 1]} : vector<2x64xf32> to vector<2x32xf32>
    %21 = vector.extract_strided_slice %9 {offsets = [0, 64], sizes = [2, 32], strides = [1, 1]} : vector<2x96xf32> to vector<2x32xf32>
    %22 = vector.extract_strided_slice %10 {offsets = [0, 64], sizes = [2, 32], strides = [1, 1]} : vector<2x96xf32> to vector<2x32xf32>
    %23 = vector.broadcast %8 : vector<1x32xf32> to vector<2x32xf32>
    %24 = arith.addf %22, %23 : vector<2x32xf32>
    %25 = arith.mulf %19, %24 : vector<2x32xf32>
    %26 = arith.addf %21, %25 : vector<2x32xf32>
    %27 = math.tanh %26 : vector<2x32xf32>
    %cst_12 = arith.constant 1.000000e+00 : f32
    %28 = vector.broadcast %cst_12 : f32 to vector<2x32xf32>
    %29 = arith.subf %28, %20 : vector<2x32xf32>
    %30 = arith.mulf %29, %27 : vector<2x32xf32>
    %31 = arith.mulf %20, %0 : vector<2x32xf32>
    %32 = arith.addf %30, %31 : vector<2x32xf32>
    %33 = vector.extract_strided_slice %6 {offsets = [2, 0], sizes = [2, 96], strides = [1, 1]} : vector<16x96xf32> to vector<2x96xf32>
    %cst_13 = arith.constant dense<0.000000e+00> : vector<2x96xf32>
    %34 = tpu.matmul %32, %7, %cst_13 {dimension_numbers = #tpu.dot_dimension_numbers<[1], [0], [0], [1], [0, 0, 1, 1], [], []>} : vector<2x32xf32>, vector<32x96xf32>, vector<2x96xf32> -> vector<2x96xf32>
    %35 = vector.extract_strided_slice %33 {offsets = [0, 0], sizes = [2, 64], strides = [1, 1]} : vector<2x96xf32> to vector<2x64xf32>
    %36 = vector.extract_strided_slice %34 {offsets = [0, 0], sizes = [2, 64], strides = [1, 1]} : vector<2x96xf32> to vector<2x64xf32>
    %37 = arith.addf %35, %36 : vector<2x64xf32>
    %38 = arith.negf %37 : vector<2x64xf32>
    %39 = math.exp %38 : vector<2x64xf32>
    %cst_14 = arith.constant 1.000000e+00 : f32
    %40 = vector.broadcast %cst_14 : f32 to vector<2x64xf32>
    %41 = arith.addf %40, %39 : vector<2x64xf32>
    %42 = arith.divf %40, %41 : vector<2x64xf32>
    %43 = vector.extract_strided_slice %42 {offsets = [0, 0], sizes = [2, 32], strides = [1, 1]} : vector<2x64xf32> to vector<2x32xf32>
    %44 = vector.extract_strided_slice %42 {offsets = [0, 32], sizes = [2, 32], strides = [1, 1]} : vector<2x64xf32> to vector<2x32xf32>
    %45 = vector.extract_strided_slice %33 {offsets = [0, 64], sizes = [2, 32], strides = [1, 1]} : vector<2x96xf32> to vector<2x32xf32>
    %46 = vector.extract_strided_slice %34 {offsets = [0, 64], sizes = [2, 32], strides = [1, 1]} : vector<2x96xf32> to vector<2x32xf32>
    %47 = vector.broadcast %8 : vector<1x32xf32> to vector<2x32xf32>
    %48 = arith.addf %46, %47 : vector<2x32xf32>
    %49 = arith.mulf %43, %48 : vector<2x32xf32>
    %50 = arith.addf %45, %49 : vector<2x32xf32>
    %51 = math.tanh %50 : vector<2x32xf32>
    %cst_15 = arith.constant 1.000000e+00 : f32
    %52 = vector.broadcast %cst_15 : f32 to vector<2x32xf32>
    %53 = arith.subf %52, %44 : vector<2x32xf32>
    %54 = arith.mulf %53, %51 : vector<2x32xf32>
    %55 = arith.mulf %44, %32 : vector<2x32xf32>
    %56 = arith.addf %54, %55 : vector<2x32xf32>
    %57 = vector.extract_strided_slice %6 {offsets = [4, 0], sizes = [2, 96], strides = [1, 1]} : vector<16x96xf32> to vector<2x96xf32>
    %cst_16 = arith.constant dense<0.000000e+00> : vector<2x96xf32>
    %58 = tpu.matmul %56, %7, %cst_16 {dimension_numbers = #tpu.dot_dimension_numbers<[1], [0], [0], [1], [0, 0, 1, 1], [], []>} : vector<2x32xf32>, vector<32x96xf32>, vector<2x96xf32> -> vector<2x96xf32>
    %59 = vector.extract_strided_slice %57 {offsets = [0, 0], sizes = [2, 64], strides = [1, 1]} : vector<2x96xf32> to vector<2x64xf32>
    %60 = vector.extract_strided_slice %58 {offsets = [0, 0], sizes = [2, 64], strides = [1, 1]} : vector<2x96xf32> to vector<2x64xf32>
    %61 = arith.addf %59, %60 : vector<2x64xf32>
    %62 = arith.negf %61 : vector<2x64xf32>
    %63 = math.exp %62 : vector<2x64xf32>
    %cst_17 = arith.constant 1.000000e+00 : f32
    %64 = vector.broadcast %cst_17 : f32 to vector<2x64xf32>
    %65 = arith.addf %64, %63 : vector<2x64xf32>
    %66 = arith.divf %64, %65 : vector<2x64xf32>
    %67 = vector.extract_strided_slice %66 {offsets = [0, 0], sizes = [2, 32], strides = [1, 1]} : vector<2x64xf32> to vector<2x32xf32>
    %68 = vector.extract_strided_slice %66 {offsets = [0, 32], sizes = [2, 32], strides = [1, 1]} : vector<2x64xf32> to vector<2x32xf32>
    %69 = vector.extract_strided_slice %57 {offsets = [0, 64], sizes = [2, 32], strides = [1, 1]} : vector<2x96xf32> to vector<2x32xf32>
    %70 = vector.extract_strided_slice %58 {offsets = [0, 64], sizes = [2, 32], strides = [1, 1]} : vector<2x96xf32> to vector<2x32xf32>
    %71 = vector.broadcast %8 : vector<1x32xf32> to vector<2x32xf32>
    %72 = arith.addf %70, %71 : vector<2x32xf32>
    %73 = arith.mulf %67, %72 : vector<2x32xf32>
    %74 = arith.addf %69, %73 : vector<2x32xf32>
    %75 = math.tanh %74 : vector<2x32xf32>
    %cst_18 = arith.constant 1.000000e+00 : f32
    %76 = vector.broadcast %cst_18 : f32 to vector<2x32xf32>
    %77 = arith.subf %76, %68 : vector<2x32xf32>
    %78 = arith.mulf %77, %75 : vector<2x32xf32>
    %79 = arith.mulf %68, %56 : vector<2x32xf32>
    %80 = arith.addf %78, %79 : vector<2x32xf32>
    %81 = vector.extract_strided_slice %6 {offsets = [6, 0], sizes = [2, 96], strides = [1, 1]} : vector<16x96xf32> to vector<2x96xf32>
    %cst_19 = arith.constant dense<0.000000e+00> : vector<2x96xf32>
    %82 = tpu.matmul %80, %7, %cst_19 {dimension_numbers = #tpu.dot_dimension_numbers<[1], [0], [0], [1], [0, 0, 1, 1], [], []>} : vector<2x32xf32>, vector<32x96xf32>, vector<2x96xf32> -> vector<2x96xf32>
    %83 = vector.extract_strided_slice %81 {offsets = [0, 0], sizes = [2, 64], strides = [1, 1]} : vector<2x96xf32> to vector<2x64xf32>
    %84 = vector.extract_strided_slice %82 {offsets = [0, 0], sizes = [2, 64], strides = [1, 1]} : vector<2x96xf32> to vector<2x64xf32>
    %85 = arith.addf %83, %84 : vector<2x64xf32>
    %86 = arith.negf %85 : vector<2x64xf32>
    %87 = math.exp %86 : vector<2x64xf32>
    %cst_20 = arith.constant 1.000000e+00 : f32
    %88 = vector.broadcast %cst_20 : f32 to vector<2x64xf32>
    %89 = arith.addf %88, %87 : vector<2x64xf32>
    %90 = arith.divf %88, %89 : vector<2x64xf32>
    %91 = vector.extract_strided_slice %90 {offsets = [0, 0], sizes = [2, 32], strides = [1, 1]} : vector<2x64xf32> to vector<2x32xf32>
    %92 = vector.extract_strided_slice %90 {offsets = [0, 32], sizes = [2, 32], strides = [1, 1]} : vector<2x64xf32> to vector<2x32xf32>
    %93 = vector.extract_strided_slice %81 {offsets = [0, 64], sizes = [2, 32], strides = [1, 1]} : vector<2x96xf32> to vector<2x32xf32>
    %94 = vector.extract_strided_slice %82 {offsets = [0, 64], sizes = [2, 32], strides = [1, 1]} : vector<2x96xf32> to vector<2x32xf32>
    %95 = vector.broadcast %8 : vector<1x32xf32> to vector<2x32xf32>
    %96 = arith.addf %94, %95 : vector<2x32xf32>
    %97 = arith.mulf %91, %96 : vector<2x32xf32>
    %98 = arith.addf %93, %97 : vector<2x32xf32>
    %99 = math.tanh %98 : vector<2x32xf32>
    %cst_21 = arith.constant 1.000000e+00 : f32
    %100 = vector.broadcast %cst_21 : f32 to vector<2x32xf32>
    %101 = arith.subf %100, %92 : vector<2x32xf32>
    %102 = arith.mulf %101, %99 : vector<2x32xf32>
    %103 = arith.mulf %92, %80 : vector<2x32xf32>
    %104 = arith.addf %102, %103 : vector<2x32xf32>
    %105 = vector.extract_strided_slice %6 {offsets = [8, 0], sizes = [2, 96], strides = [1, 1]} : vector<16x96xf32> to vector<2x96xf32>
    %cst_22 = arith.constant dense<0.000000e+00> : vector<2x96xf32>
    %106 = tpu.matmul %104, %7, %cst_22 {dimension_numbers = #tpu.dot_dimension_numbers<[1], [0], [0], [1], [0, 0, 1, 1], [], []>} : vector<2x32xf32>, vector<32x96xf32>, vector<2x96xf32> -> vector<2x96xf32>
    %107 = vector.extract_strided_slice %105 {offsets = [0, 0], sizes = [2, 64], strides = [1, 1]} : vector<2x96xf32> to vector<2x64xf32>
    %108 = vector.extract_strided_slice %106 {offsets = [0, 0], sizes = [2, 64], strides = [1, 1]} : vector<2x96xf32> to vector<2x64xf32>
    %109 = arith.addf %107, %108 : vector<2x64xf32>
    %110 = arith.negf %109 : vector<2x64xf32>
    %111 = math.exp %110 : vector<2x64xf32>
    %cst_23 = arith.constant 1.000000e+00 : f32
    %112 = vector.broadcast %cst_23 : f32 to vector<2x64xf32>
    %113 = arith.addf %112, %111 : vector<2x64xf32>
    %114 = arith.divf %112, %113 : vector<2x64xf32>
    %115 = vector.extract_strided_slice %114 {offsets = [0, 0], sizes = [2, 32], strides = [1, 1]} : vector<2x64xf32> to vector<2x32xf32>
    %116 = vector.extract_strided_slice %114 {offsets = [0, 32], sizes = [2, 32], strides = [1, 1]} : vector<2x64xf32> to vector<2x32xf32>
    %117 = vector.extract_strided_slice %105 {offsets = [0, 64], sizes = [2, 32], strides = [1, 1]} : vector<2x96xf32> to vector<2x32xf32>
    %118 = vector.extract_strided_slice %106 {offsets = [0, 64], sizes = [2, 32], strides = [1, 1]} : vector<2x96xf32> to vector<2x32xf32>
    %119 = vector.broadcast %8 : vector<1x32xf32> to vector<2x32xf32>
    %120 = arith.addf %118, %119 : vector<2x32xf32>
    %121 = arith.mulf %115, %120 : vector<2x32xf32>
    %122 = arith.addf %117, %121 : vector<2x32xf32>
    %123 = math.tanh %122 : vector<2x32xf32>
    %cst_24 = arith.constant 1.000000e+00 : f32
    %124 = vector.broadcast %cst_24 : f32 to vector<2x32xf32>
    %125 = arith.subf %124, %116 : vector<2x32xf32>
    %126 = arith.mulf %125, %123 : vector<2x32xf32>
    %127 = arith.mulf %116, %104 : vector<2x32xf32>
    %128 = arith.addf %126, %127 : vector<2x32xf32>
    %129 = vector.extract_strided_slice %6 {offsets = [10, 0], sizes = [2, 96], strides = [1, 1]} : vector<16x96xf32> to vector<2x96xf32>
    %cst_25 = arith.constant dense<0.000000e+00> : vector<2x96xf32>
    %130 = tpu.matmul %128, %7, %cst_25 {dimension_numbers = #tpu.dot_dimension_numbers<[1], [0], [0], [1], [0, 0, 1, 1], [], []>} : vector<2x32xf32>, vector<32x96xf32>, vector<2x96xf32> -> vector<2x96xf32>
    %131 = vector.extract_strided_slice %129 {offsets = [0, 0], sizes = [2, 64], strides = [1, 1]} : vector<2x96xf32> to vector<2x64xf32>
    %132 = vector.extract_strided_slice %130 {offsets = [0, 0], sizes = [2, 64], strides = [1, 1]} : vector<2x96xf32> to vector<2x64xf32>
    %133 = arith.addf %131, %132 : vector<2x64xf32>
    %134 = arith.negf %133 : vector<2x64xf32>
    %135 = math.exp %134 : vector<2x64xf32>
    %cst_26 = arith.constant 1.000000e+00 : f32
    %136 = vector.broadcast %cst_26 : f32 to vector<2x64xf32>
    %137 = arith.addf %136, %135 : vector<2x64xf32>
    %138 = arith.divf %136, %137 : vector<2x64xf32>
    %139 = vector.extract_strided_slice %138 {offsets = [0, 0], sizes = [2, 32], strides = [1, 1]} : vector<2x64xf32> to vector<2x32xf32>
    %140 = vector.extract_strided_slice %138 {offsets = [0, 32], sizes = [2, 32], strides = [1, 1]} : vector<2x64xf32> to vector<2x32xf32>
    %141 = vector.extract_strided_slice %129 {offsets = [0, 64], sizes = [2, 32], strides = [1, 1]} : vector<2x96xf32> to vector<2x32xf32>
    %142 = vector.extract_strided_slice %130 {offsets = [0, 64], sizes = [2, 32], strides = [1, 1]} : vector<2x96xf32> to vector<2x32xf32>
    %143 = vector.broadcast %8 : vector<1x32xf32> to vector<2x32xf32>
    %144 = arith.addf %142, %143 : vector<2x32xf32>
    %145 = arith.mulf %139, %144 : vector<2x32xf32>
    %146 = arith.addf %141, %145 : vector<2x32xf32>
    %147 = math.tanh %146 : vector<2x32xf32>
    %cst_27 = arith.constant 1.000000e+00 : f32
    %148 = vector.broadcast %cst_27 : f32 to vector<2x32xf32>
    %149 = arith.subf %148, %140 : vector<2x32xf32>
    %150 = arith.mulf %149, %147 : vector<2x32xf32>
    %151 = arith.mulf %140, %128 : vector<2x32xf32>
    %152 = arith.addf %150, %151 : vector<2x32xf32>
    %153 = vector.extract_strided_slice %6 {offsets = [12, 0], sizes = [2, 96], strides = [1, 1]} : vector<16x96xf32> to vector<2x96xf32>
    %cst_28 = arith.constant dense<0.000000e+00> : vector<2x96xf32>
    %154 = tpu.matmul %152, %7, %cst_28 {dimension_numbers = #tpu.dot_dimension_numbers<[1], [0], [0], [1], [0, 0, 1, 1], [], []>} : vector<2x32xf32>, vector<32x96xf32>, vector<2x96xf32> -> vector<2x96xf32>
    %155 = vector.extract_strided_slice %153 {offsets = [0, 0], sizes = [2, 64], strides = [1, 1]} : vector<2x96xf32> to vector<2x64xf32>
    %156 = vector.extract_strided_slice %154 {offsets = [0, 0], sizes = [2, 64], strides = [1, 1]} : vector<2x96xf32> to vector<2x64xf32>
    %157 = arith.addf %155, %156 : vector<2x64xf32>
    %158 = arith.negf %157 : vector<2x64xf32>
    %159 = math.exp %158 : vector<2x64xf32>
    %cst_29 = arith.constant 1.000000e+00 : f32
    %160 = vector.broadcast %cst_29 : f32 to vector<2x64xf32>
    %161 = arith.addf %160, %159 : vector<2x64xf32>
    %162 = arith.divf %160, %161 : vector<2x64xf32>
    %163 = vector.extract_strided_slice %162 {offsets = [0, 0], sizes = [2, 32], strides = [1, 1]} : vector<2x64xf32> to vector<2x32xf32>
    %164 = vector.extract_strided_slice %162 {offsets = [0, 32], sizes = [2, 32], strides = [1, 1]} : vector<2x64xf32> to vector<2x32xf32>
    %165 = vector.extract_strided_slice %153 {offsets = [0, 64], sizes = [2, 32], strides = [1, 1]} : vector<2x96xf32> to vector<2x32xf32>
    %166 = vector.extract_strided_slice %154 {offsets = [0, 64], sizes = [2, 32], strides = [1, 1]} : vector<2x96xf32> to vector<2x32xf32>
    %167 = vector.broadcast %8 : vector<1x32xf32> to vector<2x32xf32>
    %168 = arith.addf %166, %167 : vector<2x32xf32>
    %169 = arith.mulf %163, %168 : vector<2x32xf32>
    %170 = arith.addf %165, %169 : vector<2x32xf32>
    %171 = math.tanh %170 : vector<2x32xf32>
    %cst_30 = arith.constant 1.000000e+00 : f32
    %172 = vector.broadcast %cst_30 : f32 to vector<2x32xf32>
    %173 = arith.subf %172, %164 : vector<2x32xf32>
    %174 = arith.mulf %173, %171 : vector<2x32xf32>
    %175 = arith.mulf %164, %152 : vector<2x32xf32>
    %176 = arith.addf %174, %175 : vector<2x32xf32>
    %177 = vector.extract_strided_slice %6 {offsets = [14, 0], sizes = [2, 96], strides = [1, 1]} : vector<16x96xf32> to vector<2x96xf32>
    %cst_31 = arith.constant dense<0.000000e+00> : vector<2x96xf32>
    %178 = tpu.matmul %176, %7, %cst_31 {dimension_numbers = #tpu.dot_dimension_numbers<[1], [0], [0], [1], [0, 0, 1, 1], [], []>} : vector<2x32xf32>, vector<32x96xf32>, vector<2x96xf32> -> vector<2x96xf32>
    %179 = vector.extract_strided_slice %177 {offsets = [0, 0], sizes = [2, 64], strides = [1, 1]} : vector<2x96xf32> to vector<2x64xf32>
    %180 = vector.extract_strided_slice %178 {offsets = [0, 0], sizes = [2, 64], strides = [1, 1]} : vector<2x96xf32> to vector<2x64xf32>
    %181 = arith.addf %179, %180 : vector<2x64xf32>
    %182 = arith.negf %181 : vector<2x64xf32>
    %183 = math.exp %182 : vector<2x64xf32>
    %cst_32 = arith.constant 1.000000e+00 : f32
    %184 = vector.broadcast %cst_32 : f32 to vector<2x64xf32>
    %185 = arith.addf %184, %183 : vector<2x64xf32>
    %186 = arith.divf %184, %185 : vector<2x64xf32>
    %187 = vector.extract_strided_slice %186 {offsets = [0, 0], sizes = [2, 32], strides = [1, 1]} : vector<2x64xf32> to vector<2x32xf32>
    %188 = vector.extract_strided_slice %186 {offsets = [0, 32], sizes = [2, 32], strides = [1, 1]} : vector<2x64xf32> to vector<2x32xf32>
    %189 = vector.extract_strided_slice %177 {offsets = [0, 64], sizes = [2, 32], strides = [1, 1]} : vector<2x96xf32> to vector<2x32xf32>
    %190 = vector.extract_strided_slice %178 {offsets = [0, 64], sizes = [2, 32], strides = [1, 1]} : vector<2x96xf32> to vector<2x32xf32>
    %191 = vector.broadcast %8 : vector<1x32xf32> to vector<2x32xf32>
    %192 = arith.addf %190, %191 : vector<2x32xf32>
    %193 = arith.mulf %187, %192 : vector<2x32xf32>
    %194 = arith.addf %189, %193 : vector<2x32xf32>
    %195 = math.tanh %194 : vector<2x32xf32>
    %cst_33 = arith.constant 1.000000e+00 : f32
    %196 = vector.broadcast %cst_33 : f32 to vector<2x32xf32>
    %197 = arith.subf %196, %188 : vector<2x32xf32>
    %198 = arith.mulf %197, %195 : vector<2x32xf32>
    %199 = arith.mulf %188, %176 : vector<2x32xf32>
    %200 = arith.addf %198, %199 : vector<2x32xf32>
    %c0_34 = arith.constant 0 : index
    %c0_35 = arith.constant 0 : index
    %201 = vector.load %arg1[%c0_34, %c0_35] : memref<16x32xf32, #tpu.memory_space<vmem>>, vector<16x32xf32>
    %c0_36 = arith.constant 0 : index
    %c0_37 = arith.constant 0 : index
    %202 = vector.load %arg6[%c0_36, %c0_37] : memref<32x96xf32, #tpu.memory_space<vmem>>, vector<32x96xf32>
    %cst_38 = arith.constant dense<0.000000e+00> : vector<16x96xf32>
    %203 = tpu.matmul %201, %202, %cst_38 {dimension_numbers = #tpu.dot_dimension_numbers<[1], [0], [0], [1], [0, 0, 1, 1], [], []>} : vector<16x32xf32>, vector<32x96xf32>, vector<16x96xf32> -> vector<16x96xf32>
    %c0_39 = arith.constant 0 : index
    %c0_40 = arith.constant 0 : index
    %204 = vector.load %arg8[%c0_39, %c0_40] : memref<1x96xf32, #tpu.memory_space<vmem>>, vector<1x96xf32>
    %205 = vector.broadcast %204 : vector<1x96xf32> to vector<16x96xf32>
    %206 = arith.addf %203, %205 : vector<16x96xf32>
    %c0_41 = arith.constant 0 : index
    %c0_42 = arith.constant 0 : index
    %207 = vector.load %arg7[%c0_41, %c0_42] : memref<32x96xf32, #tpu.memory_space<vmem>>, vector<32x96xf32>
    %c0_43 = arith.constant 0 : index
    %c0_44 = arith.constant 0 : index
    %208 = vector.load %arg9[%c0_43, %c0_44] : memref<1x32xf32, #tpu.memory_space<vmem>>, vector<1x32xf32>
    %209 = vector.extract_strided_slice %206 {offsets = [0, 0], sizes = [2, 96], strides = [1, 1]} : vector<16x96xf32> to vector<2x96xf32>
    %cst_45 = arith.constant dense<0.000000e+00> : vector<2x96xf32>
    %210 = tpu.matmul %200, %207, %cst_45 {dimension_numbers = #tpu.dot_dimension_numbers<[1], [0], [0], [1], [0, 0, 1, 1], [], []>} : vector<2x32xf32>, vector<32x96xf32>, vector<2x96xf32> -> vector<2x96xf32>
    %211 = vector.extract_strided_slice %209 {offsets = [0, 0], sizes = [2, 64], strides = [1, 1]} : vector<2x96xf32> to vector<2x64xf32>
    %212 = vector.extract_strided_slice %210 {offsets = [0, 0], sizes = [2, 64], strides = [1, 1]} : vector<2x96xf32> to vector<2x64xf32>
    %213 = arith.addf %211, %212 : vector<2x64xf32>
    %214 = arith.negf %213 : vector<2x64xf32>
    %215 = math.exp %214 : vector<2x64xf32>
    %cst_46 = arith.constant 1.000000e+00 : f32
    %216 = vector.broadcast %cst_46 : f32 to vector<2x64xf32>
    %217 = arith.addf %216, %215 : vector<2x64xf32>
    %218 = arith.divf %216, %217 : vector<2x64xf32>
    %219 = vector.extract_strided_slice %218 {offsets = [0, 0], sizes = [2, 32], strides = [1, 1]} : vector<2x64xf32> to vector<2x32xf32>
    %220 = vector.extract_strided_slice %218 {offsets = [0, 32], sizes = [2, 32], strides = [1, 1]} : vector<2x64xf32> to vector<2x32xf32>
    %221 = vector.extract_strided_slice %209 {offsets = [0, 64], sizes = [2, 32], strides = [1, 1]} : vector<2x96xf32> to vector<2x32xf32>
    %222 = vector.extract_strided_slice %210 {offsets = [0, 64], sizes = [2, 32], strides = [1, 1]} : vector<2x96xf32> to vector<2x32xf32>
    %223 = vector.broadcast %208 : vector<1x32xf32> to vector<2x32xf32>
    %224 = arith.addf %222, %223 : vector<2x32xf32>
    %225 = arith.mulf %219, %224 : vector<2x32xf32>
    %226 = arith.addf %221, %225 : vector<2x32xf32>
    %227 = math.tanh %226 : vector<2x32xf32>
    %cst_47 = arith.constant 1.000000e+00 : f32
    %228 = vector.broadcast %cst_47 : f32 to vector<2x32xf32>
    %229 = arith.subf %228, %220 : vector<2x32xf32>
    %230 = arith.mulf %229, %227 : vector<2x32xf32>
    %231 = arith.mulf %220, %200 : vector<2x32xf32>
    %232 = arith.addf %230, %231 : vector<2x32xf32>
    %233 = vector.extract_strided_slice %232 {offsets = [0, 0], sizes = [1, 32], strides = [1, 1]} : vector<2x32xf32> to vector<1x32xf32>
    %c0_48 = arith.constant 0 : index
    %c0_49 = arith.constant 0 : index
    %234 = vector.load %arg13[%c0_48, %c0_49] : memref<16x32xf32, #tpu.memory_space<vmem>>, vector<1x32xf32>
    tpu.vector_store %arg13[%c0_48, %c0_49], %233 {strides = array<i32>} : memref<16x32xf32, #tpu.memory_space<vmem>>, vector<1x32xf32>,
    %235 = vector.extract_strided_slice %232 {offsets = [1, 0], sizes = [1, 32], strides = [1, 1]} : vector<2x32xf32> to vector<1x32xf32>
    %c8 = arith.constant 8 : index
    %c0_50 = arith.constant 0 : index
    %236 = vector.load %arg13[%c8, %c0_50] : memref<16x32xf32, #tpu.memory_space<vmem>>, vector<1x32xf32>
    tpu.vector_store %arg13[%c8, %c0_50], %235 {strides = array<i32>} : memref<16x32xf32, #tpu.memory_space<vmem>>, vector<1x32xf32>,
    %237 = vector.extract_strided_slice %206 {offsets = [2, 0], sizes = [2, 96], strides = [1, 1]} : vector<16x96xf32> to vector<2x96xf32>
    %cst_51 = arith.constant dense<0.000000e+00> : vector<2x96xf32>
    %238 = tpu.matmul %232, %207, %cst_51 {dimension_numbers = #tpu.dot_dimension_numbers<[1], [0], [0], [1], [0, 0, 1, 1], [], []>} : vector<2x32xf32>, vector<32x96xf32>, vector<2x96xf32> -> vector<2x96xf32>
    %239 = vector.extract_strided_slice %237 {offsets = [0, 0], sizes = [2, 64], strides = [1, 1]} : vector<2x96xf32> to vector<2x64xf32>
    %240 = vector.extract_strided_slice %238 {offsets = [0, 0], sizes = [2, 64], strides = [1, 1]} : vector<2x96xf32> to vector<2x64xf32>
    %241 = arith.addf %239, %240 : vector<2x64xf32>
    %242 = arith.negf %241 : vector<2x64xf32>
    %243 = math.exp %242 : vector<2x64xf32>
    %cst_52 = arith.constant 1.000000e+00 : f32
    %244 = vector.broadcast %cst_52 : f32 to vector<2x64xf32>
    %245 = arith.addf %244, %243 : vector<2x64xf32>
    %246 = arith.divf %244, %245 : vector<2x64xf32>
    %247 = vector.extract_strided_slice %246 {offsets = [0, 0], sizes = [2, 32], strides = [1, 1]} : vector<2x64xf32> to vector<2x32xf32>
    %248 = vector.extract_strided_slice %246 {offsets = [0, 32], sizes = [2, 32], strides = [1, 1]} : vector<2x64xf32> to vector<2x32xf32>
    %249 = vector.extract_strided_slice %237 {offsets = [0, 64], sizes = [2, 32], strides = [1, 1]} : vector<2x96xf32> to vector<2x32xf32>
    %250 = vector.extract_strided_slice %238 {offsets = [0, 64], sizes = [2, 32], strides = [1, 1]} : vector<2x96xf32> to vector<2x32xf32>
    %251 = vector.broadcast %208 : vector<1x32xf32> to vector<2x32xf32>
    %252 = arith.addf %250, %251 : vector<2x32xf32>
    %253 = arith.mulf %247, %252 : vector<2x32xf32>
    %254 = arith.addf %249, %253 : vector<2x32xf32>
    %255 = math.tanh %254 : vector<2x32xf32>
    %cst_53 = arith.constant 1.000000e+00 : f32
    %256 = vector.broadcast %cst_53 : f32 to vector<2x32xf32>
    %257 = arith.subf %256, %248 : vector<2x32xf32>
    %258 = arith.mulf %257, %255 : vector<2x32xf32>
    %259 = arith.mulf %248, %232 : vector<2x32xf32>
    %260 = arith.addf %258, %259 : vector<2x32xf32>
    %261 = vector.extract_strided_slice %260 {offsets = [0, 0], sizes = [1, 32], strides = [1, 1]} : vector<2x32xf32> to vector<1x32xf32>
    %c1 = arith.constant 1 : index
    %c0_54 = arith.constant 0 : index
    %262 = vector.load %arg13[%c1, %c0_54] : memref<16x32xf32, #tpu.memory_space<vmem>>, vector<1x32xf32>
    tpu.vector_store %arg13[%c1, %c0_54], %261 {strides = array<i32>} : memref<16x32xf32, #tpu.memory_space<vmem>>, vector<1x32xf32>,
    %263 = vector.extract_strided_slice %260 {offsets = [1, 0], sizes = [1, 32], strides = [1, 1]} : vector<2x32xf32> to vector<1x32xf32>
    %c9 = arith.constant 9 : index
    %c0_55 = arith.constant 0 : index
    %264 = vector.load %arg13[%c9, %c0_55] : memref<16x32xf32, #tpu.memory_space<vmem>>, vector<1x32xf32>
    tpu.vector_store %arg13[%c9, %c0_55], %263 {strides = array<i32>} : memref<16x32xf32, #tpu.memory_space<vmem>>, vector<1x32xf32>,
    %265 = vector.extract_strided_slice %206 {offsets = [4, 0], sizes = [2, 96], strides = [1, 1]} : vector<16x96xf32> to vector<2x96xf32>
    %cst_56 = arith.constant dense<0.000000e+00> : vector<2x96xf32>
    %266 = tpu.matmul %260, %207, %cst_56 {dimension_numbers = #tpu.dot_dimension_numbers<[1], [0], [0], [1], [0, 0, 1, 1], [], []>} : vector<2x32xf32>, vector<32x96xf32>, vector<2x96xf32> -> vector<2x96xf32>
    %267 = vector.extract_strided_slice %265 {offsets = [0, 0], sizes = [2, 64], strides = [1, 1]} : vector<2x96xf32> to vector<2x64xf32>
    %268 = vector.extract_strided_slice %266 {offsets = [0, 0], sizes = [2, 64], strides = [1, 1]} : vector<2x96xf32> to vector<2x64xf32>
    %269 = arith.addf %267, %268 : vector<2x64xf32>
    %270 = arith.negf %269 : vector<2x64xf32>
    %271 = math.exp %270 : vector<2x64xf32>
    %cst_57 = arith.constant 1.000000e+00 : f32
    %272 = vector.broadcast %cst_57 : f32 to vector<2x64xf32>
    %273 = arith.addf %272, %271 : vector<2x64xf32>
    %274 = arith.divf %272, %273 : vector<2x64xf32>
    %275 = vector.extract_strided_slice %274 {offsets = [0, 0], sizes = [2, 32], strides = [1, 1]} : vector<2x64xf32> to vector<2x32xf32>
    %276 = vector.extract_strided_slice %274 {offsets = [0, 32], sizes = [2, 32], strides = [1, 1]} : vector<2x64xf32> to vector<2x32xf32>
    %277 = vector.extract_strided_slice %265 {offsets = [0, 64], sizes = [2, 32], strides = [1, 1]} : vector<2x96xf32> to vector<2x32xf32>
    %278 = vector.extract_strided_slice %266 {offsets = [0, 64], sizes = [2, 32], strides = [1, 1]} : vector<2x96xf32> to vector<2x32xf32>
    %279 = vector.broadcast %208 : vector<1x32xf32> to vector<2x32xf32>
    %280 = arith.addf %278, %279 : vector<2x32xf32>
    %281 = arith.mulf %275, %280 : vector<2x32xf32>
    %282 = arith.addf %277, %281 : vector<2x32xf32>
    %283 = math.tanh %282 : vector<2x32xf32>
    %cst_58 = arith.constant 1.000000e+00 : f32
    %284 = vector.broadcast %cst_58 : f32 to vector<2x32xf32>
    %285 = arith.subf %284, %276 : vector<2x32xf32>
    %286 = arith.mulf %285, %283 : vector<2x32xf32>
    %287 = arith.mulf %276, %260 : vector<2x32xf32>
    %288 = arith.addf %286, %287 : vector<2x32xf32>
    %289 = vector.extract_strided_slice %288 {offsets = [0, 0], sizes = [1, 32], strides = [1, 1]} : vector<2x32xf32> to vector<1x32xf32>
    %c2 = arith.constant 2 : index
    %c0_59 = arith.constant 0 : index
    %290 = vector.load %arg13[%c2, %c0_59] : memref<16x32xf32, #tpu.memory_space<vmem>>, vector<1x32xf32>
    tpu.vector_store %arg13[%c2, %c0_59], %289 {strides = array<i32>} : memref<16x32xf32, #tpu.memory_space<vmem>>, vector<1x32xf32>,
    %291 = vector.extract_strided_slice %288 {offsets = [1, 0], sizes = [1, 32], strides = [1, 1]} : vector<2x32xf32> to vector<1x32xf32>
    %c10 = arith.constant 10 : index
    %c0_60 = arith.constant 0 : index
    %292 = vector.load %arg13[%c10, %c0_60] : memref<16x32xf32, #tpu.memory_space<vmem>>, vector<1x32xf32>
    tpu.vector_store %arg13[%c10, %c0_60], %291 {strides = array<i32>} : memref<16x32xf32, #tpu.memory_space<vmem>>, vector<1x32xf32>,
    %293 = vector.extract_strided_slice %206 {offsets = [6, 0], sizes = [2, 96], strides = [1, 1]} : vector<16x96xf32> to vector<2x96xf32>
    %cst_61 = arith.constant dense<0.000000e+00> : vector<2x96xf32>
    %294 = tpu.matmul %288, %207, %cst_61 {dimension_numbers = #tpu.dot_dimension_numbers<[1], [0], [0], [1], [0, 0, 1, 1], [], []>} : vector<2x32xf32>, vector<32x96xf32>, vector<2x96xf32> -> vector<2x96xf32>
    %295 = vector.extract_strided_slice %293 {offsets = [0, 0], sizes = [2, 64], strides = [1, 1]} : vector<2x96xf32> to vector<2x64xf32>
    %296 = vector.extract_strided_slice %294 {offsets = [0, 0], sizes = [2, 64], strides = [1, 1]} : vector<2x96xf32> to vector<2x64xf32>
    %297 = arith.addf %295, %296 : vector<2x64xf32>
    %298 = arith.negf %297 : vector<2x64xf32>
    %299 = math.exp %298 : vector<2x64xf32>
    %cst_62 = arith.constant 1.000000e+00 : f32
    %300 = vector.broadcast %cst_62 : f32 to vector<2x64xf32>
    %301 = arith.addf %300, %299 : vector<2x64xf32>
    %302 = arith.divf %300, %301 : vector<2x64xf32>
    %303 = vector.extract_strided_slice %302 {offsets = [0, 0], sizes = [2, 32], strides = [1, 1]} : vector<2x64xf32> to vector<2x32xf32>
    %304 = vector.extract_strided_slice %302 {offsets = [0, 32], sizes = [2, 32], strides = [1, 1]} : vector<2x64xf32> to vector<2x32xf32>
    %305 = vector.extract_strided_slice %293 {offsets = [0, 64], sizes = [2, 32], strides = [1, 1]} : vector<2x96xf32> to vector<2x32xf32>
    %306 = vector.extract_strided_slice %294 {offsets = [0, 64], sizes = [2, 32], strides = [1, 1]} : vector<2x96xf32> to vector<2x32xf32>
    %307 = vector.broadcast %208 : vector<1x32xf32> to vector<2x32xf32>
    %308 = arith.addf %306, %307 : vector<2x32xf32>
    %309 = arith.mulf %303, %308 : vector<2x32xf32>
    %310 = arith.addf %305, %309 : vector<2x32xf32>
    %311 = math.tanh %310 : vector<2x32xf32>
    %cst_63 = arith.constant 1.000000e+00 : f32
    %312 = vector.broadcast %cst_63 : f32 to vector<2x32xf32>
    %313 = arith.subf %312, %304 : vector<2x32xf32>
    %314 = arith.mulf %313, %311 : vector<2x32xf32>
    %315 = arith.mulf %304, %288 : vector<2x32xf32>
    %316 = arith.addf %314, %315 : vector<2x32xf32>
    %317 = vector.extract_strided_slice %316 {offsets = [0, 0], sizes = [1, 32], strides = [1, 1]} : vector<2x32xf32> to vector<1x32xf32>
    %c3 = arith.constant 3 : index
    %c0_64 = arith.constant 0 : index
    %318 = vector.load %arg13[%c3, %c0_64] : memref<16x32xf32, #tpu.memory_space<vmem>>, vector<1x32xf32>
    tpu.vector_store %arg13[%c3, %c0_64], %317 {strides = array<i32>} : memref<16x32xf32, #tpu.memory_space<vmem>>, vector<1x32xf32>,
    %319 = vector.extract_strided_slice %316 {offsets = [1, 0], sizes = [1, 32], strides = [1, 1]} : vector<2x32xf32> to vector<1x32xf32>
    %c11 = arith.constant 11 : index
    %c0_65 = arith.constant 0 : index
    %320 = vector.load %arg13[%c11, %c0_65] : memref<16x32xf32, #tpu.memory_space<vmem>>, vector<1x32xf32>
    tpu.vector_store %arg13[%c11, %c0_65], %319 {strides = array<i32>} : memref<16x32xf32, #tpu.memory_space<vmem>>, vector<1x32xf32>,
    %321 = vector.extract_strided_slice %206 {offsets = [8, 0], sizes = [2, 96], strides = [1, 1]} : vector<16x96xf32> to vector<2x96xf32>
    %cst_66 = arith.constant dense<0.000000e+00> : vector<2x96xf32>
    %322 = tpu.matmul %316, %207, %cst_66 {dimension_numbers = #tpu.dot_dimension_numbers<[1], [0], [0], [1], [0, 0, 1, 1], [], []>} : vector<2x32xf32>, vector<32x96xf32>, vector<2x96xf32> -> vector<2x96xf32>
    %323 = vector.extract_strided_slice %321 {offsets = [0, 0], sizes = [2, 64], strides = [1, 1]} : vector<2x96xf32> to vector<2x64xf32>
    %324 = vector.extract_strided_slice %322 {offsets = [0, 0], sizes = [2, 64], strides = [1, 1]} : vector<2x96xf32> to vector<2x64xf32>
    %325 = arith.addf %323, %324 : vector<2x64xf32>
    %326 = arith.negf %325 : vector<2x64xf32>
    %327 = math.exp %326 : vector<2x64xf32>
    %cst_67 = arith.constant 1.000000e+00 : f32
    %328 = vector.broadcast %cst_67 : f32 to vector<2x64xf32>
    %329 = arith.addf %328, %327 : vector<2x64xf32>
    %330 = arith.divf %328, %329 : vector<2x64xf32>
    %331 = vector.extract_strided_slice %330 {offsets = [0, 0], sizes = [2, 32], strides = [1, 1]} : vector<2x64xf32> to vector<2x32xf32>
    %332 = vector.extract_strided_slice %330 {offsets = [0, 32], sizes = [2, 32], strides = [1, 1]} : vector<2x64xf32> to vector<2x32xf32>
    %333 = vector.extract_strided_slice %321 {offsets = [0, 64], sizes = [2, 32], strides = [1, 1]} : vector<2x96xf32> to vector<2x32xf32>
    %334 = vector.extract_strided_slice %322 {offsets = [0, 64], sizes = [2, 32], strides = [1, 1]} : vector<2x96xf32> to vector<2x32xf32>
    %335 = vector.broadcast %208 : vector<1x32xf32> to vector<2x32xf32>
    %336 = arith.addf %334, %335 : vector<2x32xf32>
    %337 = arith.mulf %331, %336 : vector<2x32xf32>
    %338 = arith.addf %333, %337 : vector<2x32xf32>
    %339 = math.tanh %338 : vector<2x32xf32>
    %cst_68 = arith.constant 1.000000e+00 : f32
    %340 = vector.broadcast %cst_68 : f32 to vector<2x32xf32>
    %341 = arith.subf %340, %332 : vector<2x32xf32>
    %342 = arith.mulf %341, %339 : vector<2x32xf32>
    %343 = arith.mulf %332, %316 : vector<2x32xf32>
    %344 = arith.addf %342, %343 : vector<2x32xf32>
    %345 = vector.extract_strided_slice %344 {offsets = [0, 0], sizes = [1, 32], strides = [1, 1]} : vector<2x32xf32> to vector<1x32xf32>
    %c4 = arith.constant 4 : index
    %c0_69 = arith.constant 0 : index
    %346 = vector.load %arg13[%c4, %c0_69] : memref<16x32xf32, #tpu.memory_space<vmem>>, vector<1x32xf32>
    tpu.vector_store %arg13[%c4, %c0_69], %345 {strides = array<i32>} : memref<16x32xf32, #tpu.memory_space<vmem>>, vector<1x32xf32>,
    %347 = vector.extract_strided_slice %344 {offsets = [1, 0], sizes = [1, 32], strides = [1, 1]} : vector<2x32xf32> to vector<1x32xf32>
    %c12 = arith.constant 12 : index
    %c0_70 = arith.constant 0 : index
    %348 = vector.load %arg13[%c12, %c0_70] : memref<16x32xf32, #tpu.memory_space<vmem>>, vector<1x32xf32>
    tpu.vector_store %arg13[%c12, %c0_70], %347 {strides = array<i32>} : memref<16x32xf32, #tpu.memory_space<vmem>>, vector<1x32xf32>,
    %349 = vector.extract_strided_slice %206 {offsets = [10, 0], sizes = [2, 96], strides = [1, 1]} : vector<16x96xf32> to vector<2x96xf32>
    %cst_71 = arith.constant dense<0.000000e+00> : vector<2x96xf32>
    %350 = tpu.matmul %344, %207, %cst_71 {dimension_numbers = #tpu.dot_dimension_numbers<[1], [0], [0], [1], [0, 0, 1, 1], [], []>} : vector<2x32xf32>, vector<32x96xf32>, vector<2x96xf32> -> vector<2x96xf32>
    %351 = vector.extract_strided_slice %349 {offsets = [0, 0], sizes = [2, 64], strides = [1, 1]} : vector<2x96xf32> to vector<2x64xf32>
    %352 = vector.extract_strided_slice %350 {offsets = [0, 0], sizes = [2, 64], strides = [1, 1]} : vector<2x96xf32> to vector<2x64xf32>
    %353 = arith.addf %351, %352 : vector<2x64xf32>
    %354 = arith.negf %353 : vector<2x64xf32>
    %355 = math.exp %354 : vector<2x64xf32>
    %cst_72 = arith.constant 1.000000e+00 : f32
    %356 = vector.broadcast %cst_72 : f32 to vector<2x64xf32>
    %357 = arith.addf %356, %355 : vector<2x64xf32>
    %358 = arith.divf %356, %357 : vector<2x64xf32>
    %359 = vector.extract_strided_slice %358 {offsets = [0, 0], sizes = [2, 32], strides = [1, 1]} : vector<2x64xf32> to vector<2x32xf32>
    %360 = vector.extract_strided_slice %358 {offsets = [0, 32], sizes = [2, 32], strides = [1, 1]} : vector<2x64xf32> to vector<2x32xf32>
    %361 = vector.extract_strided_slice %349 {offsets = [0, 64], sizes = [2, 32], strides = [1, 1]} : vector<2x96xf32> to vector<2x32xf32>
    %362 = vector.extract_strided_slice %350 {offsets = [0, 64], sizes = [2, 32], strides = [1, 1]} : vector<2x96xf32> to vector<2x32xf32>
    %363 = vector.broadcast %208 : vector<1x32xf32> to vector<2x32xf32>
    %364 = arith.addf %362, %363 : vector<2x32xf32>
    %365 = arith.mulf %359, %364 : vector<2x32xf32>
    %366 = arith.addf %361, %365 : vector<2x32xf32>
    %367 = math.tanh %366 : vector<2x32xf32>
    %cst_73 = arith.constant 1.000000e+00 : f32
    %368 = vector.broadcast %cst_73 : f32 to vector<2x32xf32>
    %369 = arith.subf %368, %360 : vector<2x32xf32>
    %370 = arith.mulf %369, %367 : vector<2x32xf32>
    %371 = arith.mulf %360, %344 : vector<2x32xf32>
    %372 = arith.addf %370, %371 : vector<2x32xf32>
    %373 = vector.extract_strided_slice %372 {offsets = [0, 0], sizes = [1, 32], strides = [1, 1]} : vector<2x32xf32> to vector<1x32xf32>
    %c5 = arith.constant 5 : index
    %c0_74 = arith.constant 0 : index
    %374 = vector.load %arg13[%c5, %c0_74] : memref<16x32xf32, #tpu.memory_space<vmem>>, vector<1x32xf32>
    tpu.vector_store %arg13[%c5, %c0_74], %373 {strides = array<i32>} : memref<16x32xf32, #tpu.memory_space<vmem>>, vector<1x32xf32>,
    %375 = vector.extract_strided_slice %372 {offsets = [1, 0], sizes = [1, 32], strides = [1, 1]} : vector<2x32xf32> to vector<1x32xf32>
    %c13 = arith.constant 13 : index
    %c0_75 = arith.constant 0 : index
    %376 = vector.load %arg13[%c13, %c0_75] : memref<16x32xf32, #tpu.memory_space<vmem>>, vector<1x32xf32>
    tpu.vector_store %arg13[%c13, %c0_75], %375 {strides = array<i32>} : memref<16x32xf32, #tpu.memory_space<vmem>>, vector<1x32xf32>,
    %377 = vector.extract_strided_slice %206 {offsets = [12, 0], sizes = [2, 96], strides = [1, 1]} : vector<16x96xf32> to vector<2x96xf32>
    %cst_76 = arith.constant dense<0.000000e+00> : vector<2x96xf32>
    %378 = tpu.matmul %372, %207, %cst_76 {dimension_numbers = #tpu.dot_dimension_numbers<[1], [0], [0], [1], [0, 0, 1, 1], [], []>} : vector<2x32xf32>, vector<32x96xf32>, vector<2x96xf32> -> vector<2x96xf32>
    %379 = vector.extract_strided_slice %377 {offsets = [0, 0], sizes = [2, 64], strides = [1, 1]} : vector<2x96xf32> to vector<2x64xf32>
    %380 = vector.extract_strided_slice %378 {offsets = [0, 0], sizes = [2, 64], strides = [1, 1]} : vector<2x96xf32> to vector<2x64xf32>
    %381 = arith.addf %379, %380 : vector<2x64xf32>
    %382 = arith.negf %381 : vector<2x64xf32>
    %383 = math.exp %382 : vector<2x64xf32>
    %cst_77 = arith.constant 1.000000e+00 : f32
    %384 = vector.broadcast %cst_77 : f32 to vector<2x64xf32>
    %385 = arith.addf %384, %383 : vector<2x64xf32>
    %386 = arith.divf %384, %385 : vector<2x64xf32>
    %387 = vector.extract_strided_slice %386 {offsets = [0, 0], sizes = [2, 32], strides = [1, 1]} : vector<2x64xf32> to vector<2x32xf32>
    %388 = vector.extract_strided_slice %386 {offsets = [0, 32], sizes = [2, 32], strides = [1, 1]} : vector<2x64xf32> to vector<2x32xf32>
    %389 = vector.extract_strided_slice %377 {offsets = [0, 64], sizes = [2, 32], strides = [1, 1]} : vector<2x96xf32> to vector<2x32xf32>
    %390 = vector.extract_strided_slice %378 {offsets = [0, 64], sizes = [2, 32], strides = [1, 1]} : vector<2x96xf32> to vector<2x32xf32>
    %391 = vector.broadcast %208 : vector<1x32xf32> to vector<2x32xf32>
    %392 = arith.addf %390, %391 : vector<2x32xf32>
    %393 = arith.mulf %387, %392 : vector<2x32xf32>
    %394 = arith.addf %389, %393 : vector<2x32xf32>
    %395 = math.tanh %394 : vector<2x32xf32>
    %cst_78 = arith.constant 1.000000e+00 : f32
    %396 = vector.broadcast %cst_78 : f32 to vector<2x32xf32>
    %397 = arith.subf %396, %388 : vector<2x32xf32>
    %398 = arith.mulf %397, %395 : vector<2x32xf32>
    %399 = arith.mulf %388, %372 : vector<2x32xf32>
    %400 = arith.addf %398, %399 : vector<2x32xf32>
    %401 = vector.extract_strided_slice %400 {offsets = [0, 0], sizes = [1, 32], strides = [1, 1]} : vector<2x32xf32> to vector<1x32xf32>
    %c6 = arith.constant 6 : index
    %c0_79 = arith.constant 0 : index
    %402 = vector.load %arg13[%c6, %c0_79] : memref<16x32xf32, #tpu.memory_space<vmem>>, vector<1x32xf32>
    tpu.vector_store %arg13[%c6, %c0_79], %401 {strides = array<i32>} : memref<16x32xf32, #tpu.memory_space<vmem>>, vector<1x32xf32>,
    %403 = vector.extract_strided_slice %400 {offsets = [1, 0], sizes = [1, 32], strides = [1, 1]} : vector<2x32xf32> to vector<1x32xf32>
    %c14 = arith.constant 14 : index
    %c0_80 = arith.constant 0 : index
    %404 = vector.load %arg13[%c14, %c0_80] : memref<16x32xf32, #tpu.memory_space<vmem>>, vector<1x32xf32>
    tpu.vector_store %arg13[%c14, %c0_80], %403 {strides = array<i32>} : memref<16x32xf32, #tpu.memory_space<vmem>>, vector<1x32xf32>,
    %405 = vector.extract_strided_slice %206 {offsets = [14, 0], sizes = [2, 96], strides = [1, 1]} : vector<16x96xf32> to vector<2x96xf32>
    %cst_81 = arith.constant dense<0.000000e+00> : vector<2x96xf32>
    %406 = tpu.matmul %400, %207, %cst_81 {dimension_numbers = #tpu.dot_dimension_numbers<[1], [0], [0], [1], [0, 0, 1, 1], [], []>} : vector<2x32xf32>, vector<32x96xf32>, vector<2x96xf32> -> vector<2x96xf32>
    %407 = vector.extract_strided_slice %405 {offsets = [0, 0], sizes = [2, 64], strides = [1, 1]} : vector<2x96xf32> to vector<2x64xf32>
    %408 = vector.extract_strided_slice %406 {offsets = [0, 0], sizes = [2, 64], strides = [1, 1]} : vector<2x96xf32> to vector<2x64xf32>
    %409 = arith.addf %407, %408 : vector<2x64xf32>
    %410 = arith.negf %409 : vector<2x64xf32>
    %411 = math.exp %410 : vector<2x64xf32>
    %cst_82 = arith.constant 1.000000e+00 : f32
    %412 = vector.broadcast %cst_82 : f32 to vector<2x64xf32>
    %413 = arith.addf %412, %411 : vector<2x64xf32>
    %414 = arith.divf %412, %413 : vector<2x64xf32>
    %415 = vector.extract_strided_slice %414 {offsets = [0, 0], sizes = [2, 32], strides = [1, 1]} : vector<2x64xf32> to vector<2x32xf32>
    %416 = vector.extract_strided_slice %414 {offsets = [0, 32], sizes = [2, 32], strides = [1, 1]} : vector<2x64xf32> to vector<2x32xf32>
    %417 = vector.extract_strided_slice %405 {offsets = [0, 64], sizes = [2, 32], strides = [1, 1]} : vector<2x96xf32> to vector<2x32xf32>
    %418 = vector.extract_strided_slice %406 {offsets = [0, 64], sizes = [2, 32], strides = [1, 1]} : vector<2x96xf32> to vector<2x32xf32>
    %419 = vector.broadcast %208 : vector<1x32xf32> to vector<2x32xf32>
    %420 = arith.addf %418, %419 : vector<2x32xf32>
    %421 = arith.mulf %415, %420 : vector<2x32xf32>
    %422 = arith.addf %417, %421 : vector<2x32xf32>
    %423 = math.tanh %422 : vector<2x32xf32>
    %cst_83 = arith.constant 1.000000e+00 : f32
    %424 = vector.broadcast %cst_83 : f32 to vector<2x32xf32>
    %425 = arith.subf %424, %416 : vector<2x32xf32>
    %426 = arith.mulf %425, %423 : vector<2x32xf32>
    %427 = arith.mulf %416, %400 : vector<2x32xf32>
    %428 = arith.addf %426, %427 : vector<2x32xf32>
    %429 = vector.extract_strided_slice %428 {offsets = [0, 0], sizes = [1, 32], strides = [1, 1]} : vector<2x32xf32> to vector<1x32xf32>
    %c7 = arith.constant 7 : index
    %c0_84 = arith.constant 0 : index
    %430 = vector.load %arg13[%c7, %c0_84] : memref<16x32xf32, #tpu.memory_space<vmem>>, vector<1x32xf32>
    tpu.vector_store %arg13[%c7, %c0_84], %429 {strides = array<i32>} : memref<16x32xf32, #tpu.memory_space<vmem>>, vector<1x32xf32>,
    %431 = vector.extract_strided_slice %428 {offsets = [1, 0], sizes = [1, 32], strides = [1, 1]} : vector<2x32xf32> to vector<1x32xf32>
    %c15 = arith.constant 15 : index
    %c0_85 = arith.constant 0 : index
    %432 = vector.load %arg13[%c15, %c0_85] : memref<16x32xf32, #tpu.memory_space<vmem>>, vector<1x32xf32>
    tpu.vector_store %arg13[%c15, %c0_85], %431 {strides = array<i32>} : memref<16x32xf32, #tpu.memory_space<vmem>>, vector<1x32xf32>,
    %c0_86 = arith.constant 0 : index
    %c0_87 = arith.constant 0 : index
    %433 = vector.load %arg13[%c0_86, %c0_87] : memref<16x32xf32, #tpu.memory_space<vmem>>, vector<16x32xf32>
    %c0_88 = arith.constant 0 : index
    %c0_89 = arith.constant 0 : index
    %434 = vector.load %arg10[%c0_88, %c0_89] : memref<32x64xf32, #tpu.memory_space<vmem>>, vector<32x64xf32>
    %cst_90 = arith.constant dense<0.000000e+00> : vector<16x64xf32>
    %435 = tpu.matmul %433, %434, %cst_90 {dimension_numbers = #tpu.dot_dimension_numbers<[1], [0], [0], [1], [0, 0, 1, 1], [], []>} : vector<16x32xf32>, vector<32x64xf32>, vector<16x64xf32> -> vector<16x64xf32>
    %c0_91 = arith.constant 0 : index
    %c0_92 = arith.constant 0 : index
    %436 = vector.load %arg11[%c0_91, %c0_92] : memref<1x64xf32, #tpu.memory_space<vmem>>, vector<1x64xf32>
    %437 = vector.broadcast %436 : vector<1x64xf32> to vector<16x64xf32>
    %438 = arith.addf %435, %437 : vector<16x64xf32>
    %cst_93 = arith.constant dense<0xFF800000> : vector<16xf32>
    %439 = vector.multi_reduction <maximumf>, %438, %cst_93 [1] : vector<16x64xf32> to vector<16xf32>
    %440 = vector.shape_cast %439 : vector<16xf32> to vector<16x1xf32>
    %441 = vector.broadcast %440 : vector<16x1xf32> to vector<16x64xf32>
    %442 = arith.subf %438, %441 : vector<16x64xf32>
    %443 = math.exp %442 : vector<16x64xf32>
    %cst_94 = arith.constant dense<0.000000e+00> : vector<16xf32>
    %444 = vector.multi_reduction <add>, %443, %cst_94 [1] : vector<16x64xf32> to vector<16xf32>
    %445 = vector.shape_cast %444 : vector<16xf32> to vector<16x1xf32>
    %446 = vector.broadcast %445 : vector<16x1xf32> to vector<16x64xf32>
    %447 = arith.divf %443, %446 : vector<16x64xf32>
    %448 = vector.shape_cast %447 : vector<16x64xf32> to vector<2x8x64xf32>
    %c0_95 = arith.constant 0 : index
    %c0_96 = arith.constant 0 : index
    %c0_97 = arith.constant 0 : index
    %449 = vector.load %arg12[%c0_95, %c0_96, %c0_97] : memref<2x8x64xf32, #tpu.memory_space<vmem>>, vector<2x8x64xf32>
    tpu.vector_store %arg12[%c0_95, %c0_96, %c0_97], %448 {strides = array<i32>} : memref<2x8x64xf32, #tpu.memory_space<vmem>>, vector<2x8x64xf32>,
    return
  }
}

</mosaic_0001>

<llo_original>
// kernel: model_forward.1
$region0: #{model_forward.1}
  #allocation0 [shape = 'u32[]', space=smem, size = 0x4, offset = 0x4, fixed_abs, tag = 'smem constant byte address 0x4 - core index']
  #allocation1 [shape = 'u32[144,128]{1,0:T(1,128)}', space=vmem, size = 0x12000, scoped, tag = 'internal scratch']
  #allocation2 [shape = 'f32[16,32]{1,0:T(8,128)}', space=vmem, size = 0x2000, scoped, tag = 'scratch operand']
  %s0 = inlined_call_operand.vmem [shape: f32[16,32], index: 0, kind: input, shape index: {}]
  %s1 = inlined_call_operand.vmem [shape: f32[16,32], index: 1, kind: input, shape index: {}]
  %s2 = inlined_call_operand.vmem [shape: f32[32,96], index: 2, kind: input, shape index: {}]
  %s3 = inlined_call_operand.vmem [shape: f32[32,96], index: 3, kind: input, shape index: {}]
  %s4 = inlined_call_operand.vmem [shape: f32[1,96], index: 4, kind: input, shape index: {}]
  %s5 = inlined_call_operand.vmem [shape: f32[1,32], index: 5, kind: input, shape index: {}]
  %s6 = inlined_call_operand.vmem [shape: f32[32,96], index: 6, kind: input, shape index: {}]
  %s7 = inlined_call_operand.vmem [shape: f32[32,96], index: 7, kind: input, shape index: {}]
  %s8 = inlined_call_operand.vmem [shape: f32[1,96], index: 8, kind: input, shape index: {}]
  %s9 = inlined_call_operand.vmem [shape: f32[1,32], index: 9, kind: input, shape index: {}]
  %s10 = inlined_call_operand.vmem [shape: f32[32,64], index: 10, kind: input, shape index: {}]
  %s11 = inlined_call_operand.vmem [shape: f32[1,64], index: 11, kind: input, shape index: {}]
  %s12 = inlined_call_operand.hbm [shape: f32[2,8,64], index: 12, kind: output, shape index: {}]
  %s13 = sld [smem:[#allocation0]]
  $region58: #{model_forward.1} parent=0
    _
  %s15 = ssub.s32 1, %s13
  %s16 = scalar_select 0, %s15, %s13
  $region1: #{model_forward.1} parent=0
    #allocation3 [shape = 'u8[8192]{0}', space=vmem, size = 0x2000, scoped, tag = 'output window, operand 0, single buffered']
    #allocation4 [shape = 's32[1]{0}', space=sflag, size = 0x4, scoped, tag = 'scoped memory for model_forward.1']
    %17 = vsyncpa [#allocation4], 0
    // Predicated region
    $region2: #{model_forward.1} parent=1 // pred_check
      _
    $region3: #{model_forward.1} parent=1 // pred_check_branch
      %19 = sbr.rel (0) target = $region5
    $region4: #{model_forward.1} parent=1 // pred_region
      _
    $region5: #{model_forward.1} parent=1 // pred_fallthru
      _
    // Predicated region
    $region6: #{model_forward.1} parent=1 // pred_check
      _
    $region7: #{model_forward.1} parent=1 // pred_check_branch
      %21 = sbr.rel (0) target = $region9
    $region8: #{model_forward.1} parent=1 // pred_region
      _
    $region9: #{model_forward.1} parent=1 // pred_fallthru
      _
    // Predicated region
    $region10: #{model_forward.1} parent=1 // pred_check
      _
    $region11: #{model_forward.1} parent=1 // pred_check_branch
      %23 = sbr.rel (0) target = $region13
    $region12: #{model_forward.1} parent=1 // pred_region
      _
    $region13: #{model_forward.1} parent=1 // pred_fallthru
      _
    // Predicated region
    $region14: #{model_forward.1} parent=1 // pred_check
      _
    $region15: #{model_forward.1} parent=1 // pred_check_branch
      %25 = sbr.rel (0) target = $region17
    $region16: #{model_forward.1} parent=1 // pred_region
      _
    $region17: #{model_forward.1} parent=1 // pred_fallthru
      _
    // Predicated region
    $region18: #{model_forward.1} parent=1 // pred_check
      _
    $region19: #{model_forward.1} parent=1 // pred_check_branch
      %27 = sbr.rel (0) target = $region21
    $region20: #{model_forward.1} parent=1 // pred_region
      _
    $region21: #{model_forward.1} parent=1 // pred_fallthru
      _
    // Predicated region
    $region22: #{model_forward.1} parent=1 // pred_check
      _
    $region23: #{model_forward.1} parent=1 // pred_check_branch
      %29 = sbr.rel (0) target = $region25
    $region24: #{model_forward.1} parent=1 // pred_region
      _
    $region25: #{model_forward.1} parent=1 // pred_fallthru
      _
    // Predicated region
    $region26: #{model_forward.1} parent=1 // pred_check
      _
    $region27: #{model_forward.1} parent=1 // pred_check_branch
      %31 = sbr.rel (0) target = $region29
    $region28: #{model_forward.1} parent=1 // pred_region
      _
    $region29: #{model_forward.1} parent=1 // pred_fallthru
      _
    // Predicated region
    $region30: #{model_forward.1} parent=1 // pred_check
      _
    $region31: #{model_forward.1} parent=1 // pred_check_branch
      %33 = sbr.rel (0) target = $region33
    $region32: #{model_forward.1} parent=1 // pred_region
      _
    $region33: #{model_forward.1} parent=1 // pred_fallthru
      _
    // Predicated region
    $region34: #{model_forward.1} parent=1 // pred_check
      _
    $region35: #{model_forward.1} parent=1 // pred_check_branch
      %35 = sbr.rel (0) target = $region37
    $region36: #{model_forward.1} parent=1 // pred_region
      _
    $region37: #{model_forward.1} parent=1 // pred_fallthru
      _
    // Predicated region
    $region38: #{model_forward.1} parent=1 // pred_check
      _
    $region39: #{model_forward.1} parent=1 // pred_check_branch
      %37 = sbr.rel (0) target = $region41
    $region40: #{model_forward.1} parent=1 // pred_region
      _
    $region41: #{model_forward.1} parent=1 // pred_fallthru
      _
    // Predicated region
    $region42: #{model_forward.1} parent=1 // pred_check
      _
    $region43: #{model_forward.1} parent=1 // pred_check_branch
      %39 = sbr.rel (0) target = $region45
    $region44: #{model_forward.1} parent=1 // pred_region
      _
    $region45: #{model_forward.1} parent=1 // pred_fallthru
      _
    // Predicated region
    $region46: #{model_forward.1} parent=1 // pred_check
      _
    $region47: #{model_forward.1} parent=1 // pred_check_branch
      %41 = sbr.rel (0) target = $region49
    $region48: #{model_forward.1} parent=1 // pred_region
      _
    $region49: #{model_forward.1} parent=1 // pred_fallthru
      _
    %v42 = vld [vmem:[%s0] sm:$0xff]
    %v43 = vld [vmem:[%s0 + $0x8] sm:$0xff]
    %v44 = vld [vmem:[%s2] sm:$0xff]
    %v45 = vld [vmem:[%s2 + $0x8] sm:$0xff]
    %v46 = vld [vmem:[%s2 + $0x10] sm:$0xff]
    %v47 = vld [vmem:[%s2 + $0x18] sm:$0xff]
    %v48 = vld [vmem:[%s4] sm:$0x1]
    %v50 = vlaneseq
    %v51 = vshrl.u32 %v50, 7
    %v52 = vsub.s32 0, %v51
    %v53 = vrot.slane %v48, %v52
    %vm55 = vcmask 261120
    %v57 = vsel %vm55, %v42, 0
    %v60 = vsel %vm55, %v43, 0
    %62 = vmatprep.subr.mxu0 0.0
    %63 = vmatpush1.msra.mxu0 0.0
    %64 = vmatprep.subr.mxu0 0.0
    %65 = vmatpush1.msra.mxu0 0.0
    %66 = vmatprep.subr.mxu0 0.0
    %67 = vmatpush1.msra.mxu0 0.0
    %68 = vmatprep.subr.mxu0 0.0
    %69 = vmatpush1.msra.mxu0 0.0
    %70 = vmatprep.subr.mxu0 0.0
    %71 = vmatpush1.msra.mxu0 0.0
    %72 = vmatprep.subr.mxu0 0.0
    %73 = vmatpush1.msra.mxu0 0.0
    %74 = vmatprep.subr.mxu0 0.0
    %75 = vmatpush1.msra.mxu0 0.0
    %76 = vmatprep.subr.mxu0 0.0
    %77 = vmatpush1.msra.mxu0 0.0
    %78 = vmatprep.subr.mxu0 0.0
    %79 = vmatpush1.msra.mxu0 0.0
    %80 = vmatprep.subr.mxu0 0.0
    %81 = vmatpush1.msra.mxu0 0.0
    %82 = vmatprep.subr.mxu0 0.0
    %83 = vmatpush1.msra.mxu0 0.0
    %84 = vmatprep.subr.mxu0 0.0
    %85 = vmatpush1.msra.mxu0 0.0
    %86 = vmatprep.subr.mxu0 0.0
    %87 = vmatpush1.msra.mxu0 %v47
    %88 = vmatprep.subr.mxu0 0.0
    %89 = vmatpush1.msra.mxu0 %v46
    %90 = vmatprep.subr.mxu0 0.0
    %91 = vmatpush1.msra.mxu0 %v45
    %92 = vmatprep.subr.mxu0 0.0
    %93 = vmatpush1.msra.mxu0 %v44
    %94 = vmatprep.subr.mxu0 0.0
    %95 = vmatpush2.msra.mxu0 0.0
    %96 = vmatprep.subr.mxu0 0.0
    %97 = vmatpush2.msra.mxu0 0.0
    %98 = vmatprep.subr.mxu0 0.0
    %99 = vmatpush2.msra.mxu0 0.0
    %100 = vmatprep.subr.mxu0 0.0
    %101 = vmatpush2.msra.mxu0 0.0
    %102 = vmatprep.subr.mxu0 0.0
    %103 = vmatpush2.msra.mxu0 0.0
    %104 = vmatprep.subr.mxu0 0.0
    %105 = vmatpush2.msra.mxu0 0.0
    %106 = vmatprep.subr.mxu0 0.0
    %107 = vmatpush2.msra.mxu0 0.0
    %108 = vmatprep.subr.mxu0 0.0
    %109 = vmatpush2.msra.mxu0 0.0
    %110 = vmatprep.subr.mxu0 0.0
    %111 = vmatpush2.msra.mxu0 0.0
    %112 = vmatprep.subr.mxu0 0.0
    %113 = vmatpush2.msra.mxu0 0.0
    %114 = vmatprep.subr.mxu0 0.0
    %115 = vmatpush2.msra.mxu0 0.0
    %116 = vmatprep.subr.mxu0 0.0
    %117 = vmatpush2.msra.mxu0 0.0
    %118 = vmatprep.subr.mxu0 0.0
    %119 = vmatpush2.msra.mxu0 0.0
    %120 = vmatprep.subr.mxu0 0.0
    %121 = vmatpush2.msra.mxu0 0.0
    %122 = vmatprep.subr.mxu0 0.0
    %123 = vmatpush2.msra.mxu0 0.0
    %124 = vmatprep.subr.mxu0 0.0
    %125 = vmatpush2.msra.mxu0 0.0
    %126 = vmatprep.mubr.f32.mxu0 0.0
    %127 = vmatmul.mubr.f32.gmra.mxu0 %v57
    %v128 = vpop.f32.mrf.mxu0
    %v129 = vadd.f32 %v53, %v128
    %v130 = vpop.f32.mrf.mxu0
    %131 = vmatprep.mubr.f32.mxu0 0.0
    %132 = vmatmul.mubr.f32.gmra.mxu0 %v60
    %v133 = vpop.f32.mrf.mxu0
    %v134 = vadd.f32 %v53, %v133
    %v135 = vpop.f32.mrf.mxu0
    %136 = vdwg.mxu0
    %v137 = vld [vmem:[%s3] sm:$0xff]
    %v138 = vld [vmem:[%s3 + $0x8] sm:$0xff]
    %v139 = vld [vmem:[%s3 + $0x10] sm:$0xff]
    %v140 = vld [vmem:[%s3 + $0x18] sm:$0xff]
    %v141 = vld [vmem:[%s5] sm:$0x1]
    %v143 = vsel %vm55, 0.0, 0
    %145 = vmatprep.subr.mxu0 0.0
    %146 = vmatpush1.msra.mxu0 0.0
    %147 = vmatprep.subr.mxu0 0.0
    %148 = vmatpush1.msra.mxu0 0.0
    %149 = vmatprep.subr.mxu0 0.0
    %150 = vmatpush1.msra.mxu0 0.0
    %151 = vmatprep.subr.mxu0 0.0
    %152 = vmatpush1.msra.mxu0 0.0
    %153 = vmatprep.subr.mxu0 0.0
    %154 = vmatpush1.msra.mxu0 0.0
    %155 = vmatprep.subr.mxu0 0.0
    %156 = vmatpush1.msra.mxu0 0.0
    %157 = vmatprep.subr.mxu0 0.0
    %158 = vmatpush1.msra.mxu0 0.0
    %159 = vmatprep.subr.mxu0 0.0
    %160 = vmatpush1.msra.mxu0 0.0
    %161 = vmatprep.subr.mxu0 0.0
    %162 = vmatpush1.msra.mxu0 0.0
    %163 = vmatprep.subr.mxu0 0.0
    %164 = vmatpush1.msra.mxu0 0.0
    %165 = vmatprep.subr.mxu0 0.0
    %166 = vmatpush1.msra.mxu0 0.0
    %167 = vmatprep.subr.mxu0 0.0
    %168 = vmatpush1.msra.mxu0 0.0
    %169 = vmatprep.subr.mxu0 0.0
    %170 = vmatpush1.msra.mxu0 %v140
    %171 = vmatprep.subr.mxu0 0.0
    %172 = vmatpush1.msra.mxu0 %v139
    %173 = vmatprep.subr.mxu0 0.0
    %174 = vmatpush1.msra.mxu0 %v138
    %175 = vmatprep.subr.mxu0 0.0
    %176 = vmatpush1.msra.mxu0 %v137
    %177 = vmatprep.subr.mxu0 0.0
    %178 = vmatpush2.msra.mxu0 0.0
    %179 = vmatprep.subr.mxu0 0.0
    %180 = vmatpush2.msra.mxu0 0.0
    %181 = vmatprep.subr.mxu0 0.0
    %182 = vmatpush2.msra.mxu0 0.0
    %183 = vmatprep.subr.mxu0 0.0
    %184 = vmatpush2.msra.mxu0 0.0
    %185 = vmatprep.subr.mxu0 0.0
    %186 = vmatpush2.msra.mxu0 0.0
    %187 = vmatprep.subr.mxu0 0.0
    %188 = vmatpush2.msra.mxu0 0.0
    %189 = vmatprep.subr.mxu0 0.0
    %190 = vmatpush2.msra.mxu0 0.0
    %191 = vmatprep.subr.mxu0 0.0
    %192 = vmatpush2.msra.mxu0 0.0
    %193 = vmatprep.subr.mxu0 0.0
    %194 = vmatpush2.msra.mxu0 0.0
    %195 = vmatprep.subr.mxu0 0.0
    %196 = vmatpush2.msra.mxu0 0.0
    %197 = vmatprep.subr.mxu0 0.0
    %198 = vmatpush2.msra.mxu0 0.0
    %199 = vmatprep.subr.mxu0 0.0
    %200 = vmatpush2.msra.mxu0 0.0
    %201 = vmatprep.subr.mxu0 0.0
    %202 = vmatpush2.msra.mxu0 0.0
    %203 = vmatprep.subr.mxu0 0.0
    %204 = vmatpush2.msra.mxu0 0.0
    %205 = vmatprep.subr.mxu0 0.0
    %206 = vmatpush2.msra.mxu0 0.0
    %207 = vmatprep.subr.mxu0 0.0
    %208 = vmatpush2.msra.mxu0 0.0
    %209 = vmatprep.mubr.f32.mxu0 0.0
    %210 = vmatmul.mubr.f32.gmra.mxu0 %v143
    %v211 = vpop.f32.mrf.mxu0
    %v212 = vadd.f32 0.0, %v211
    %v213 = vpop.f32.mrf.mxu0
    %214 = vdwg.mxu0
    %v215 = vadd.f32 %v129, %v212
    %v216 = vxor.u32 %v215, 2147483648
    %v217 = vmul.f32 %v216, 1.442695
    %v218 = vpow.pop %v217
    %v219 = vadd.f32 %v218, 1.0
    %v220 = vrcp.pop %v219
    %v221 = vmul.f32 1.0, %v220
    %v223 = vlaneseq
    %v224 = vshrl.u32 %v223, 7
    %v225 = vsub.s32 0, %v224
    %v226 = vrot.slane %v141, %v225
    %227 = vrot.lane.b32.xlu0 %v226, 64
    %v228 = vpop.permute.xlu0 %227
    %v230 = vadd.f32 %v212, %v228
    %232 = vrot.lane.b32.xlu0 %v230, 64
    %v233 = vpop.permute.xlu0 %232
    %v235 = vmul.f32 %v221, %v233
    %237 = vrot.lane.b32.xlu0 %v235, 64
    %v238 = vpop.permute.xlu0 %237
    %v240 = vadd.f32 %v129, %v238
    %v241 = vtanh.pop %v240
    %v242 = vsub.f32 1.0, %v221
    %244 = vrot.lane.b32.xlu0 %v241, 96
    %v245 = vpop.permute.xlu0 %244
    %v247 = vmul.f32 %v242, %v245
    %v248 = vmul.f32 %v221, 0.0
    %v249 = vadd.f32 %v247, %v248
    %251 = vrot.lane.b32.xlu0 %v249, 96
    %v252 = vpop.permute.xlu0 %251
    %v253 = vsel %vm55, %v252, 0
    %255 = vmatprep.subr.mxu0 0.0
    %256 = vmatpush1.msra.mxu0 0.0
    %257 = vmatprep.subr.mxu0 0.0
    %258 = vmatpush1.msra.mxu0 0.0
    %259 = vmatprep.subr.mxu0 0.0
    %260 = vmatpush1.msra.mxu0 0.0
    %261 = vmatprep.subr.mxu0 0.0
    %262 = vmatpush1.msra.mxu0 0.0
    %263 = vmatprep.subr.mxu0 0.0
    %264 = vmatpush1.msra.mxu0 0.0
    %265 = vmatprep.subr.mxu0 0.0
    %266 = vmatpush1.msra.mxu0 0.0
    %267 = vmatprep.subr.mxu0 0.0
    %268 = vmatpush1.msra.mxu0 0.0
    %269 = vmatprep.subr.mxu0 0.0
    %270 = vmatpush1.msra.mxu0 0.0
    %271 = vmatprep.subr.mxu0 0.0
    %272 = vmatpush1.msra.mxu0 0.0
    %273 = vmatprep.subr.mxu0 0.0
    %274 = vmatpush1.msra.mxu0 0.0
    %275 = vmatprep.subr.mxu0 0.0
    %276 = vmatpush1.msra.mxu0 0.0
    %277 = vmatprep.subr.mxu0 0.0
    %278 = vmatpush1.msra.mxu0 0.0
    %279 = vmatprep.subr.mxu0 0.0
    %280 = vmatpush1.msra.mxu0 %v140
    %281 = vmatprep.subr.mxu0 0.0
    %282 = vmatpush1.msra.mxu0 %v139
    %283 = vmatprep.subr.mxu0 0.0
    %284 = vmatpush1.msra.mxu0 %v138
    %285 = vmatprep.subr.mxu0 0.0
    %286 = vmatpush1.msra.mxu0 %v137
    %287 = vmatprep.subr.mxu0 0.0
    %288 = vmatpush2.msra.mxu0 0.0
    %289 = vmatprep.subr.mxu0 0.0
    %290 = vmatpush2.msra.mxu0 0.0
    %291 = vmatprep.subr.mxu0 0.0
    %292 = vmatpush2.msra.mxu0 0.0
    %293 = vmatprep.subr.mxu0 0.0
    %294 = vmatpush2.msra.mxu0 0.0
    %295 = vmatprep.subr.mxu0 0.0
    %296 = vmatpush2.msra.mxu0 0.0
    %297 = vmatprep.subr.mxu0 0.0
    %298 = vmatpush2.msra.mxu0 0.0
    %299 = vmatprep.subr.mxu0 0.0
    %300 = vmatpush2.msra.mxu0 0.0
    %301 = vmatprep.subr.mxu0 0.0
    %302 = vmatpush2.msra.mxu0 0.0
    %303 = vmatprep.subr.mxu0 0.0
    %304 = vmatpush2.msra.mxu0 0.0
    %305 = vmatprep.subr.mxu0 0.0
    %306 = vmatpush2.msra.mxu0 0.0
    %307 = vmatprep.subr.mxu0 0.0
    %308 = vmatpush2.msra.mxu0 0.0
    %309 = vmatprep.subr.mxu0 0.0
    %310 = vmatpush2.msra.mxu0 0.0
    %311 = vmatprep.subr.mxu0 0.0
    %312 = vmatpush2.msra.mxu0 0.0
    %313 = vmatprep.subr.mxu0 0.0
    %314 = vmatpush2.msra.mxu0 0.0
    %315 = vmatprep.subr.mxu0 0.0
    %316 = vmatpush2.msra.mxu0 0.0
    %317 = vmatprep.subr.mxu0 0.0
    %318 = vmatpush2.msra.mxu0 0.0
    %319 = vmatprep.mubr.f32.mxu0 0.0
    %320 = vmatmul.mubr.f32.gmra.mxu0 %v253
    %v321 = vpop.f32.mrf.mxu0
    %v322 = vadd.f32 0.0, %v321
    %v323 = vpop.f32.mrf.mxu0
    %324 = vdwg.mxu0
    %v326 = vrot.slane %v322, 6
    %v328 = vadd.f32 %v129, %v326
    %v329 = vxor.u32 %v328, 2147483648
    %v330 = vmul.f32 %v329, 1.442695
    %v331 = vpow.pop %v330
    %v332 = vadd.f32 %v331, 1.0
    %v333 = vrcp.pop %v332
    %v334 = vmul.f32 1.0, %v333
    %v335 = vadd.f32 %v322, %v228
    %v337 = vrot.slane %v335, 6
    %338 = vrot.lane.b32.xlu0 %v337, 64
    %v339 = vpop.permute.xlu0 %338
    %v341 = vmul.f32 %v334, %v339
    %343 = vrot.lane.b32.xlu0 %v341, 64
    %v344 = vpop.permute.xlu0 %343
    %v346 = vadd.f32 %v129, %v344
    %v347 = vtanh.pop %v346
    %v348 = vsub.f32 1.0, %v334
    %350 = vrot.lane.b32.xlu0 %v347, 96
    %v351 = vpop.permute.xlu0 %350
    %v353 = vmul.f32 %v348, %v351
    %v354 = vrot.slane %v249, 6
    %v356 = vmul.f32 %v334, %v354
    %v357 = vadd.f32 %v353, %v356
    %v359 = vrot.slane %v357, 2
    %360 = vrot.lane.b32.xlu0 %v359, 96
    %v361 = vpop.permute.xlu0 %360
    %v362 = vsel %vm55, %v361, 0
    %364 = vmatprep.subr.mxu0 0.0
    %365 = vmatpush1.msra.mxu0 0.0
    %366 = vmatprep.subr.mxu0 0.0
    %367 = vmatpush1.msra.mxu0 0.0
    %368 = vmatprep.subr.mxu0 0.0
    %369 = vmatpush1.msra.mxu0 0.0
    %370 = vmatprep.subr.mxu0 0.0
    %371 = vmatpush1.msra.mxu0 0.0
    %372 = vmatprep.subr.mxu0 0.0
    %373 = vmatpush1.msra.mxu0 0.0
    %374 = vmatprep.subr.mxu0 0.0
    %375 = vmatpush1.msra.mxu0 0.0
    %376 = vmatprep.subr.mxu0 0.0
    %377 = vmatpush1.msra.mxu0 0.0
    %378 = vmatprep.subr.mxu0 0.0
    %379 = vmatpush1.msra.mxu0 0.0
    %380 = vmatprep.subr.mxu0 0.0
    %381 = vmatpush1.msra.mxu0 0.0
    %382 = vmatprep.subr.mxu0 0.0
    %383 = vmatpush1.msra.mxu0 0.0
    %384 = vmatprep.subr.mxu0 0.0
    %385 = vmatpush1.msra.mxu0 0.0
    %386 = vmatprep.subr.mxu0 0.0
    %387 = vmatpush1.msra.mxu0 0.0
    %388 = vmatprep.subr.mxu0 0.0
    %389 = vmatpush1.msra.mxu0 %v140
    %390 = vmatprep.subr.mxu0 0.0
    %391 = vmatpush1.msra.mxu0 %v139
    %392 = vmatprep.subr.mxu0 0.0
    %393 = vmatpush1.msra.mxu0 %v138
    %394 = vmatprep.subr.mxu0 0.0
    %395 = vmatpush1.msra.mxu0 %v137
    %396 = vmatprep.subr.mxu0 0.0
    %397 = vmatpush2.msra.mxu0 0.0
    %398 = vmatprep.subr.mxu0 0.0
    %399 = vmatpush2.msra.mxu0 0.0
    %400 = vmatprep.subr.mxu0 0.0
    %401 = vmatpush2.msra.mxu0 0.0
    %402 = vmatprep.subr.mxu0 0.0
    %403 = vmatpush2.msra.mxu0 0.0
    %404 = vmatprep.subr.mxu0 0.0
    %405 = vmatpush2.msra.mxu0 0.0
    %406 = vmatprep.subr.mxu0 0.0
    %407 = vmatpush2.msra.mxu0 0.0
    %408 = vmatprep.subr.mxu0 0.0
    %409 = vmatpush2.msra.mxu0 0.0
    %410 = vmatprep.subr.mxu0 0.0
    %411 = vmatpush2.msra.mxu0 0.0
    %412 = vmatprep.subr.mxu0 0.0
    %413 = vmatpush2.msra.mxu0 0.0
    %414 = vmatprep.subr.mxu0 0.0
    %415 = vmatpush2.msra.mxu0 0.0
    %416 = vmatprep.subr.mxu0 0.0
    %417 = vmatpush2.msra.mxu0 0.0
    %418 = vmatprep.subr.mxu0 0.0
    %419 = vmatpush2.msra.mxu0 0.0
    %420 = vmatprep.subr.mxu0 0.0
    %421 = vmatpush2.msra.mxu0 0.0
    %422 = vmatprep.subr.mxu0 0.0
    %423 = vmatpush2.msra.mxu0 0.0
    %424 = vmatprep.subr.mxu0 0.0
    %425 = vmatpush2.msra.mxu0 0.0
    %426 = vmatprep.subr.mxu0 0.0
    %427 = vmatpush2.msra.mxu0 0.0
    %428 = vmatprep.mubr.f32.mxu0 0.0
    %429 = vmatmul.mubr.f32.gmra.mxu0 %v362
    %v430 = vpop.f32.mrf.mxu0
    %v431 = vadd.f32 0.0, %v430
    %v432 = vpop.f32.mrf.mxu0
    %433 = vdwg.mxu0
    %v435 = vrot.slane %v431, 4
    %v437 = vadd.f32 %v129, %v435
    %v438 = vxor.u32 %v437, 2147483648
    %v439 = vmul.f32 %v438, 1.442695
    %v440 = vpow.pop %v439
    %v441 = vadd.f32 %v440, 1.0
    %v442 = vrcp.pop %v441
    %v443 = vmul.f32 1.0, %v442
    %v444 = vadd.f32 %v431, %v228
    %v446 = vrot.slane %v444, 4
    %447 = vrot.lane.b32.xlu0 %v446, 64
    %v448 = vpop.permute.xlu0 %447
    %v450 = vmul.f32 %v443, %v448
    %452 = vrot.lane.b32.xlu0 %v450, 64
    %v453 = vpop.permute.xlu0 %452
    %v455 = vadd.f32 %v129, %v453
    %v456 = vtanh.pop %v455
    %v457 = vsub.f32 1.0, %v443
    %459 = vrot.lane.b32.xlu0 %v456, 96
    %v460 = vpop.permute.xlu0 %459
    %v462 = vmul.f32 %v457, %v460
    %v463 = vrot.slane %v357, 6
    %v465 = vmul.f32 %v443, %v463
    %v466 = vadd.f32 %v462, %v465
    %v468 = vrot.slane %v466, 4
    %469 = vrot.lane.b32.xlu0 %v468, 96
    %v470 = vpop.permute.xlu0 %469
    %v471 = vsel %vm55, %v470, 0
    %473 = vmatprep.subr.mxu0 0.0
    %474 = vmatpush1.msra.mxu0 0.0
    %475 = vmatprep.subr.mxu0 0.0
    %476 = vmatpush1.msra.mxu0 0.0
    %477 = vmatprep.subr.mxu0 0.0
    %478 = vmatpush1.msra.mxu0 0.0
    %479 = vmatprep.subr.mxu0 0.0
    %480 = vmatpush1.msra.mxu0 0.0
    %481 = vmatprep.subr.mxu0 0.0
    %482 = vmatpush1.msra.mxu0 0.0
    %483 = vmatprep.subr.mxu0 0.0
    %484 = vmatpush1.msra.mxu0 0.0
    %485 = vmatprep.subr.mxu0 0.0
    %486 = vmatpush1.msra.mxu0 0.0
    %487 = vmatprep.subr.mxu0 0.0
    %488 = vmatpush1.msra.mxu0 0.0
    %489 = vmatprep.subr.mxu0 0.0
    %490 = vmatpush1.msra.mxu0 0.0
    %491 = vmatprep.subr.mxu0 0.0
    %492 = vmatpush1.msra.mxu0 0.0
    %493 = vmatprep.subr.mxu0 0.0
    %494 = vmatpush1.msra.mxu0 0.0
    %495 = vmatprep.subr.mxu0 0.0
    %496 = vmatpush1.msra.mxu0 0.0
    %497 = vmatprep.subr.mxu0 0.0
    %498 = vmatpush1.msra.mxu0 %v140
    %499 = vmatprep.subr.mxu0 0.0
    %500 = vmatpush1.msra.mxu0 %v139
    %501 = vmatprep.subr.mxu0 0.0
    %502 = vmatpush1.msra.mxu0 %v138
    %503 = vmatprep.subr.mxu0 0.0
    %504 = vmatpush1.msra.mxu0 %v137
    %505 = vmatprep.subr.mxu0 0.0
    %506 = vmatpush2.msra.mxu0 0.0
    %507 = vmatprep.subr.mxu0 0.0
    %508 = vmatpush2.msra.mxu0 0.0
    %509 = vmatprep.subr.mxu0 0.0
    %510 = vmatpush2.msra.mxu0 0.0
    %511 = vmatprep.subr.mxu0 0.0
    %512 = vmatpush2.msra.mxu0 0.0
    %513 = vmatprep.subr.mxu0 0.0
    %514 = vmatpush2.msra.mxu0 0.0
    %515 = vmatprep.subr.mxu0 0.0
    %516 = vmatpush2.msra.mxu0 0.0
    %517 = vmatprep.subr.mxu0 0.0
    %518 = vmatpush2.msra.mxu0 0.0
    %519 = vmatprep.subr.mxu0 0.0
    %520 = vmatpush2.msra.mxu0 0.0
    %521 = vmatprep.subr.mxu0 0.0
    %522 = vmatpush2.msra.mxu0 0.0
    %523 = vmatprep.subr.mxu0 0.0
    %524 = vmatpush2.msra.mxu0 0.0
    %525 = vmatprep.subr.mxu0 0.0
    %526 = vmatpush2.msra.mxu0 0.0
    %527 = vmatprep.subr.mxu0 0.0
    %528 = vmatpush2.msra.mxu0 0.0
    %529 = vmatprep.subr.mxu0 0.0
    %530 = vmatpush2.msra.mxu0 0.0
    %531 = vmatprep.subr.mxu0 0.0
    %532 = vmatpush2.msra.mxu0 0.0
    %533 = vmatprep.subr.mxu0 0.0
    %534 = vmatpush2.msra.mxu0 0.0
    %535 = vmatprep.subr.mxu0 0.0
    %536 = vmatpush2.msra.mxu0 0.0
    %537 = vmatprep.mubr.f32.mxu0 0.0
    %538 = vmatmul.mubr.f32.gmra.mxu0 %v471
    %v539 = vpop.f32.mrf.mxu0
    %v540 = vadd.f32 0.0, %v539
    %v541 = vpop.f32.mrf.mxu0
    %542 = vdwg.mxu0
    %v544 = vrot.slane %v540, 2
    %v546 = vadd.f32 %v129, %v544
    %v547 = vxor.u32 %v546, 2147483648
    %v548 = vmul.f32 %v547, 1.442695
    %v549 = vpow.pop %v548
    %v550 = vadd.f32 %v549, 1.0
    %v551 = vrcp.pop %v550
    %v552 = vmul.f32 1.0, %v551
    %v553 = vadd.f32 %v540, %v228
    %v555 = vrot.slane %v553, 2
    %556 = vrot.lane.b32.xlu0 %v555, 64
    %v557 = vpop.permute.xlu0 %556
    %v559 = vmul.f32 %v552, %v557
    %561 = vrot.lane.b32.xlu0 %v559, 64
    %v562 = vpop.permute.xlu0 %561
    %v564 = vadd.f32 %v129, %v562
    %v565 = vtanh.pop %v564
    %v566 = vsub.f32 1.0, %v552
    %568 = vrot.lane.b32.xlu0 %v565, 96
    %v569 = vpop.permute.xlu0 %568
    %v571 = vmul.f32 %v566, %v569
    %v572 = vrot.slane %v466, 6
    %v574 = vmul.f32 %v552, %v572
    %v575 = vadd.f32 %v571, %v574
    %v577 = vrot.slane %v575, 6
    %578 = vrot.lane.b32.xlu0 %v577, 96
    %v579 = vpop.permute.xlu0 %578
    %v580 = vsel %vm55, %v579, 0
    %582 = vmatprep.subr.mxu0 0.0
    %583 = vmatpush1.msra.mxu0 0.0
    %584 = vmatprep.subr.mxu0 0.0
    %585 = vmatpush1.msra.mxu0 0.0
    %586 = vmatprep.subr.mxu0 0.0
    %587 = vmatpush1.msra.mxu0 0.0
    %588 = vmatprep.subr.mxu0 0.0
    %589 = vmatpush1.msra.mxu0 0.0
    %590 = vmatprep.subr.mxu0 0.0
    %591 = vmatpush1.msra.mxu0 0.0
    %592 = vmatprep.subr.mxu0 0.0
    %593 = vmatpush1.msra.mxu0 0.0
    %594 = vmatprep.subr.mxu0 0.0
    %595 = vmatpush1.msra.mxu0 0.0
    %596 = vmatprep.subr.mxu0 0.0
    %597 = vmatpush1.msra.mxu0 0.0
    %598 = vmatprep.subr.mxu0 0.0
    %599 = vmatpush1.msra.mxu0 0.0
    %600 = vmatprep.subr.mxu0 0.0
    %601 = vmatpush1.msra.mxu0 0.0
    %602 = vmatprep.subr.mxu0 0.0
    %603 = vmatpush1.msra.mxu0 0.0
    %604 = vmatprep.subr.mxu0 0.0
    %605 = vmatpush1.msra.mxu0 0.0
    %606 = vmatprep.subr.mxu0 0.0
    %607 = vmatpush1.msra.mxu0 %v140
    %608 = vmatprep.subr.mxu0 0.0
    %609 = vmatpush1.msra.mxu0 %v139
    %610 = vmatprep.subr.mxu0 0.0
    %611 = vmatpush1.msra.mxu0 %v138
    %612 = vmatprep.subr.mxu0 0.0
    %613 = vmatpush1.msra.mxu0 %v137
    %614 = vmatprep.subr.mxu0 0.0
    %615 = vmatpush2.msra.mxu0 0.0
    %616 = vmatprep.subr.mxu0 0.0
    %617 = vmatpush2.msra.mxu0 0.0
    %618 = vmatprep.subr.mxu0 0.0
    %619 = vmatpush2.msra.mxu0 0.0
    %620 = vmatprep.subr.mxu0 0.0
    %621 = vmatpush2.msra.mxu0 0.0
    %622 = vmatprep.subr.mxu0 0.0
    %623 = vmatpush2.msra.mxu0 0.0
    %624 = vmatprep.subr.mxu0 0.0
    %625 = vmatpush2.msra.mxu0 0.0
    %626 = vmatprep.subr.mxu0 0.0
    %627 = vmatpush2.msra.mxu0 0.0
    %628 = vmatprep.subr.mxu0 0.0
    %629 = vmatpush2.msra.mxu0 0.0
    %630 = vmatprep.subr.mxu0 0.0
    %631 = vmatpush2.msra.mxu0 0.0
    %632 = vmatprep.subr.mxu0 0.0
    %633 = vmatpush2.msra.mxu0 0.0
    %634 = vmatprep.subr.mxu0 0.0
    %635 = vmatpush2.msra.mxu0 0.0
    %636 = vmatprep.subr.mxu0 0.0
    %637 = vmatpush2.msra.mxu0 0.0
    %638 = vmatprep.subr.mxu0 0.0
    %639 = vmatpush2.msra.mxu0 0.0
    %640 = vmatprep.subr.mxu0 0.0
    %641 = vmatpush2.msra.mxu0 0.0
    %642 = vmatprep.subr.mxu0 0.0
    %643 = vmatpush2.msra.mxu0 0.0
    %644 = vmatprep.subr.mxu0 0.0
    %645 = vmatpush2.msra.mxu0 0.0
    %646 = vmatprep.mubr.f32.mxu0 0.0
    %647 = vmatmul.mubr.f32.gmra.mxu0 %v580
    %v648 = vpop.f32.mrf.mxu0
    %v649 = vadd.f32 0.0, %v648
    %v650 = vpop.f32.mrf.mxu0
    %651 = vdwg.mxu0
    %v652 = vadd.f32 %v134, %v649
    %v653 = vxor.u32 %v652, 2147483648
    %v654 = vmul.f32 %v653, 1.442695
    %v655 = vpow.pop %v654
    %v656 = vadd.f32 %v655, 1.0
    %v657 = vrcp.pop %v656
    %v658 = vmul.f32 1.0, %v657
    %v659 = vadd.f32 %v649, %v228
    %661 = vrot.lane.b32.xlu0 %v659, 64
    %v662 = vpop.permute.xlu0 %661
    %v664 = vmul.f32 %v658, %v662
    %666 = vrot.lane.b32.xlu0 %v664, 64
    %v667 = vpop.permute.xlu0 %666
    %v669 = vadd.f32 %v134, %v667
    %v670 = vtanh.pop %v669
    %v671 = vsub.f32 1.0, %v658
    %673 = vrot.lane.b32.xlu0 %v670, 96
    %v674 = vpop.permute.xlu0 %673
    %v676 = vmul.f32 %v671, %v674
    %v678 = vmul.f32 %v658, %v577
    %v679 = vadd.f32 %v676, %v678
    %681 = vrot.lane.b32.xlu0 %v679, 96
    %v682 = vpop.permute.xlu0 %681
    %v683 = vsel %vm55, %v682, 0
    %685 = vmatprep.subr.mxu0 0.0
    %686 = vmatpush1.msra.mxu0 0.0
    %687 = vmatprep.subr.mxu0 0.0
    %688 = vmatpush1.msra.mxu0 0.0
    %689 = vmatprep.subr.mxu0 0.0
    %690 = vmatpush1.msra.mxu0 0.0
    %691 = vmatprep.subr.mxu0 0.0
    %692 = vmatpush1.msra.mxu0 0.0
    %693 = vmatprep.subr.mxu0 0.0
    %694 = vmatpush1.msra.mxu0 0.0
    %695 = vmatprep.subr.mxu0 0.0
    %696 = vmatpush1.msra.mxu0 0.0
    %697 = vmatprep.subr.mxu0 0.0
    %698 = vmatpush1.msra.mxu0 0.0
    %699 = vmatprep.subr.mxu0 0.0
    %700 = vmatpush1.msra.mxu0 0.0
    %701 = vmatprep.subr.mxu0 0.0
    %702 = vmatpush1.msra.mxu0 0.0
    %703 = vmatprep.subr.mxu0 0.0
    %704 = vmatpush1.msra.mxu0 0.0
    %705 = vmatprep.subr.mxu0 0.0
    %706 = vmatpush1.msra.mxu0 0.0
    %707 = vmatprep.subr.mxu0 0.0
    %708 = vmatpush1.msra.mxu0 0.0
    %709 = vmatprep.subr.mxu0 0.0
    %710 = vmatpush1.msra.mxu0 %v140
    %711 = vmatprep.subr.mxu0 0.0
    %712 = vmatpush1.msra.mxu0 %v139
    %713 = vmatprep.subr.mxu0 0.0
    %714 = vmatpush1.msra.mxu0 %v138
    %715 = vmatprep.subr.mxu0 0.0
    %716 = vmatpush1.msra.mxu0 %v137
    %717 = vmatprep.subr.mxu0 0.0
    %718 = vmatpush2.msra.mxu0 0.0
    %719 = vmatprep.subr.mxu0 0.0
    %720 = vmatpush2.msra.mxu0 0.0
    %721 = vmatprep.subr.mxu0 0.0
    %722 = vmatpush2.msra.mxu0 0.0
    %723 = vmatprep.subr.mxu0 0.0
    %724 = vmatpush2.msra.mxu0 0.0
    %725 = vmatprep.subr.mxu0 0.0
    %726 = vmatpush2.msra.mxu0 0.0
    %727 = vmatprep.subr.mxu0 0.0
    %728 = vmatpush2.msra.mxu0 0.0
    %729 = vmatprep.subr.mxu0 0.0
    %730 = vmatpush2.msra.mxu0 0.0
    %731 = vmatprep.subr.mxu0 0.0
    %732 = vmatpush2.msra.mxu0 0.0
    %733 = vmatprep.subr.mxu0 0.0
    %734 = vmatpush2.msra.mxu0 0.0
    %735 = vmatprep.subr.mxu0 0.0
    %736 = vmatpush2.msra.mxu0 0.0
    %737 = vmatprep.subr.mxu0 0.0
    %738 = vmatpush2.msra.mxu0 0.0
    %739 = vmatprep.subr.mxu0 0.0
    %740 = vmatpush2.msra.mxu0 0.0
    %741 = vmatprep.subr.mxu0 0.0
    %742 = vmatpush2.msra.mxu0 0.0
    %743 = vmatprep.subr.mxu0 0.0
    %744 = vmatpush2.msra.mxu0 0.0
    %745 = vmatprep.subr.mxu0 0.0
    %746 = vmatpush2.msra.mxu0 0.0
    %747 = vmatprep.subr.mxu0 0.0
    %748 = vmatpush2.msra.mxu0 0.0
    %749 = vmatprep.mubr.f32.mxu0 0.0
    %750 = vmatmul.mubr.f32.gmra.mxu0 %v683
    %v751 = vpop.f32.mrf.mxu0
    %v752 = vadd.f32 0.0, %v751
    %v753 = vpop.f32.mrf.mxu0
    %754 = vdwg.mxu0
    %v756 = vrot.slane %v752, 6
    %v758 = vadd.f32 %v134, %v756
    %v759 = vxor.u32 %v758, 2147483648
    %v760 = vmul.f32 %v759, 1.442695
    %v761 = vpow.pop %v760
    %v762 = vadd.f32 %v761, 1.0
    %v763 = vrcp.pop %v762
    %v764 = vmul.f32 1.0, %v763
    %v765 = vadd.f32 %v752, %v228
    %v767 = vrot.slane %v765, 6
    %768 = vrot.lane.b32.xlu0 %v767, 64
    %v769 = vpop.permute.xlu0 %768
    %v771 = vmul.f32 %v764, %v769
    %773 = vrot.lane.b32.xlu0 %v771, 64
    %v774 = vpop.permute.xlu0 %773
    %v776 = vadd.f32 %v134, %v774
    %v777 = vtanh.pop %v776
    %v778 = vsub.f32 1.0, %v764
    %780 = vrot.lane.b32.xlu0 %v777, 96
    %v781 = vpop.permute.xlu0 %780
    %v783 = vmul.f32 %v778, %v781
    %v784 = vrot.slane %v679, 6
    %v786 = vmul.f32 %v764, %v784
    %v787 = vadd.f32 %v783, %v786
    %v789 = vrot.slane %v787, 2
    %790 = vrot.lane.b32.xlu0 %v789, 96
    %v791 = vpop.permute.xlu0 %790
    %v792 = vsel %vm55, %v791, 0
    %794 = vmatprep.subr.mxu0 0.0
    %795 = vmatpush1.msra.mxu0 0.0
    %796 = vmatprep.subr.mxu0 0.0
    %797 = vmatpush1.msra.mxu0 0.0
    %798 = vmatprep.subr.mxu0 0.0
    %799 = vmatpush1.msra.mxu0 0.0
    %800 = vmatprep.subr.mxu0 0.0
    %801 = vmatpush1.msra.mxu0 0.0
    %802 = vmatprep.subr.mxu0 0.0
    %803 = vmatpush1.msra.mxu0 0.0
    %804 = vmatprep.subr.mxu0 0.0
    %805 = vmatpush1.msra.mxu0 0.0
    %806 = vmatprep.subr.mxu0 0.0
    %807 = vmatpush1.msra.mxu0 0.0
    %808 = vmatprep.subr.mxu0 0.0
    %809 = vmatpush1.msra.mxu0 0.0
    %810 = vmatprep.subr.mxu0 0.0
    %811 = vmatpush1.msra.mxu0 0.0
    %812 = vmatprep.subr.mxu0 0.0
    %813 = vmatpush1.msra.mxu0 0.0
    %814 = vmatprep.subr.mxu0 0.0
    %815 = vmatpush1.msra.mxu0 0.0
    %816 = vmatprep.subr.mxu0 0.0
    %817 = vmatpush1.msra.mxu0 0.0
    %818 = vmatprep.subr.mxu0 0.0
    %819 = vmatpush1.msra.mxu0 %v140
    %820 = vmatprep.subr.mxu0 0.0
    %821 = vmatpush1.msra.mxu0 %v139
    %822 = vmatprep.subr.mxu0 0.0
    %823 = vmatpush1.msra.mxu0 %v138
    %824 = vmatprep.subr.mxu0 0.0
    %825 = vmatpush1.msra.mxu0 %v137
    %826 = vmatprep.subr.mxu0 0.0
    %827 = vmatpush2.msra.mxu0 0.0
    %828 = vmatprep.subr.mxu0 0.0
    %829 = vmatpush2.msra.mxu0 0.0
    %830 = vmatprep.subr.mxu0 0.0
    %831 = vmatpush2.msra.mxu0 0.0
    %832 = vmatprep.subr.mxu0 0.0
    %833 = vmatpush2.msra.mxu0 0.0
    %834 = vmatprep.subr.mxu0 0.0
    %835 = vmatpush2.msra.mxu0 0.0
    %836 = vmatprep.subr.mxu0 0.0
    %837 = vmatpush2.msra.mxu0 0.0
    %838 = vmatprep.subr.mxu0 0.0
    %839 = vmatpush2.msra.mxu0 0.0
    %840 = vmatprep.subr.mxu0 0.0
    %841 = vmatpush2.msra.mxu0 0.0
    %842 = vmatprep.subr.mxu0 0.0
    %843 = vmatpush2.msra.mxu0 0.0
    %844 = vmatprep.subr.mxu0 0.0
    %845 = vmatpush2.msra.mxu0 0.0
    %846 = vmatprep.subr.mxu0 0.0
    %847 = vmatpush2.msra.mxu0 0.0
    %848 = vmatprep.subr.mxu0 0.0
    %849 = vmatpush2.msra.mxu0 0.0
    %850 = vmatprep.subr.mxu0 0.0
    %851 = vmatpush2.msra.mxu0 0.0
    %852 = vmatprep.subr.mxu0 0.0
    %853 = vmatpush2.msra.mxu0 0.0
    %854 = vmatprep.subr.mxu0 0.0
    %855 = vmatpush2.msra.mxu0 0.0
    %856 = vmatprep.subr.mxu0 0.0
    %857 = vmatpush2.msra.mxu0 0.0
    %858 = vmatprep.mubr.f32.mxu0 0.0
    %859 = vmatmul.mubr.f32.gmra.mxu0 %v792
    %v860 = vpop.f32.mrf.mxu0
    %v861 = vadd.f32 0.0, %v860
    %v862 = vpop.f32.mrf.mxu0
    %863 = vdwg.mxu0
    %v865 = vrot.slane %v861, 4
    %v867 = vadd.f32 %v134, %v865
    %v868 = vxor.u32 %v867, 2147483648
    %v869 = vmul.f32 %v868, 1.442695
    %v870 = vpow.pop %v869
    %v871 = vadd.f32 %v870, 1.0
    %v872 = vrcp.pop %v871
    %v873 = vmul.f32 1.0, %v872
    %v874 = vadd.f32 %v861, %v228
    %v876 = vrot.slane %v874, 4
    %877 = vrot.lane.b32.xlu0 %v876, 64
    %v878 = vpop.permute.xlu0 %877
    %v880 = vmul.f32 %v873, %v878
    %882 = vrot.lane.b32.xlu0 %v880, 64
    %v883 = vpop.permute.xlu0 %882
    %v885 = vadd.f32 %v134, %v883
    %v886 = vtanh.pop %v885
    %v887 = vsub.f32 1.0, %v873
    %889 = vrot.lane.b32.xlu0 %v886, 96
    %v890 = vpop.permute.xlu0 %889
    %v892 = vmul.f32 %v887, %v890
    %v893 = vrot.slane %v787, 6
    %v895 = vmul.f32 %v873, %v893
    %v896 = vadd.f32 %v892, %v895
    %v898 = vrot.slane %v896, 4
    %899 = vrot.lane.b32.xlu0 %v898, 96
    %v900 = vpop.permute.xlu0 %899
    %v901 = vsel %vm55, %v900, 0
    %903 = vmatprep.subr.mxu0 0.0
    %904 = vmatpush1.msra.mxu0 0.0
    %905 = vmatprep.subr.mxu0 0.0
    %906 = vmatpush1.msra.mxu0 0.0
    %907 = vmatprep.subr.mxu0 0.0
    %908 = vmatpush1.msra.mxu0 0.0
    %909 = vmatprep.subr.mxu0 0.0
    %910 = vmatpush1.msra.mxu0 0.0
    %911 = vmatprep.subr.mxu0 0.0
    %912 = vmatpush1.msra.mxu0 0.0
    %913 = vmatprep.subr.mxu0 0.0
    %914 = vmatpush1.msra.mxu0 0.0
    %915 = vmatprep.subr.mxu0 0.0
    %916 = vmatpush1.msra.mxu0 0.0
    %917 = vmatprep.subr.mxu0 0.0
    %918 = vmatpush1.msra.mxu0 0.0
    %919 = vmatprep.subr.mxu0 0.0
    %920 = vmatpush1.msra.mxu0 0.0
    %921 = vmatprep.subr.mxu0 0.0
    %922 = vmatpush1.msra.mxu0 0.0
    %923 = vmatprep.subr.mxu0 0.0
    %924 = vmatpush1.msra.mxu0 0.0
    %925 = vmatprep.subr.mxu0 0.0
    %926 = vmatpush1.msra.mxu0 0.0
    %927 = vmatprep.subr.mxu0 0.0
    %928 = vmatpush1.msra.mxu0 %v140
    %929 = vmatprep.subr.mxu0 0.0
    %930 = vmatpush1.msra.mxu0 %v139
    %931 = vmatprep.subr.mxu0 0.0
    %932 = vmatpush1.msra.mxu0 %v138
    %933 = vmatprep.subr.mxu0 0.0
    %934 = vmatpush1.msra.mxu0 %v137
    %935 = vmatprep.subr.mxu0 0.0
    %936 = vmatpush2.msra.mxu0 0.0
    %937 = vmatprep.subr.mxu0 0.0
    %938 = vmatpush2.msra.mxu0 0.0
    %939 = vmatprep.subr.mxu0 0.0
    %940 = vmatpush2.msra.mxu0 0.0
    %941 = vmatprep.subr.mxu0 0.0
    %942 = vmatpush2.msra.mxu0 0.0
    %943 = vmatprep.subr.mxu0 0.0
    %944 = vmatpush2.msra.mxu0 0.0
    %945 = vmatprep.subr.mxu0 0.0
    %946 = vmatpush2.msra.mxu0 0.0
    %947 = vmatprep.subr.mxu0 0.0
    %948 = vmatpush2.msra.mxu0 0.0
    %949 = vmatprep.subr.mxu0 0.0
    %950 = vmatpush2.msra.mxu0 0.0
    %951 = vmatprep.subr.mxu0 0.0
    %952 = vmatpush2.msra.mxu0 0.0
    %953 = vmatprep.subr.mxu0 0.0
    %954 = vmatpush2.msra.mxu0 0.0
    %955 = vmatprep.subr.mxu0 0.0
    %956 = vmatpush2.msra.mxu0 0.0
    %957 = vmatprep.subr.mxu0 0.0
    %958 = vmatpush2.msra.mxu0 0.0
    %959 = vmatprep.subr.mxu0 0.0
    %960 = vmatpush2.msra.mxu0 0.0
    %961 = vmatprep.subr.mxu0 0.0
    %962 = vmatpush2.msra.mxu0 0.0
    %963 = vmatprep.subr.mxu0 0.0
    %964 = vmatpush2.msra.mxu0 0.0
    %965 = vmatprep.subr.mxu0 0.0
    %966 = vmatpush2.msra.mxu0 0.0
    %967 = vmatprep.mubr.f32.mxu0 0.0
    %968 = vmatmul.mubr.f32.gmra.mxu0 %v901
    %v969 = vpop.f32.mrf.mxu0
    %v970 = vadd.f32 0.0, %v969
    %v971 = vpop.f32.mrf.mxu0
    %972 = vdwg.mxu0
    %v974 = vrot.slane %v970, 2
    %v976 = vadd.f32 %v134, %v974
    %v977 = vxor.u32 %v976, 2147483648
    %v978 = vmul.f32 %v977, 1.442695
    %v979 = vpow.pop %v978
    %v980 = vadd.f32 %v979, 1.0
    %v981 = vrcp.pop %v980
    %v982 = vmul.f32 1.0, %v981
    %v983 = vadd.f32 %v970, %v228
    %v985 = vrot.slane %v983, 2
    %986 = vrot.lane.b32.xlu0 %v985, 64
    %v987 = vpop.permute.xlu0 %986
    %v989 = vmul.f32 %v982, %v987
    %991 = vrot.lane.b32.xlu0 %v989, 64
    %v992 = vpop.permute.xlu0 %991
    %v994 = vadd.f32 %v134, %v992
    %v995 = vtanh.pop %v994
    %v996 = vsub.f32 1.0, %v982
    %998 = vrot.lane.b32.xlu0 %v995, 96
    %v999 = vpop.permute.xlu0 %998
    %v1001 = vmul.f32 %v996, %v999
    %v1002 = vrot.slane %v896, 6
    %v1004 = vmul.f32 %v982, %v1002
    %v1005 = vadd.f32 %v1001, %v1004
    %v1006 = vld [vmem:[%s1] sm:$0xff]
    %v1007 = vld [vmem:[%s1 + $0x8] sm:$0xff]
    %v1008 = vld [vmem:[%s6] sm:$0xff]
    %v1009 = vld [vmem:[%s6 + $0x8] sm:$0xff]
    %v1010 = vld [vmem:[%s6 + $0x10] sm:$0xff]
    %v1011 = vld [vmem:[%s6 + $0x18] sm:$0xff]
    %v1012 = vld [vmem:[%s8] sm:$0x1]
    %v1014 = vlaneseq
    %v1015 = vshrl.u32 %v1014, 7
    %v1016 = vsub.s32 0, %v1015
    %v1017 = vrot.slane %v1012, %v1016
    %v1020 = vsel %vm55, %v1006, 0
    %v1023 = vsel %vm55, %v1007, 0
    %1025 = vmatprep.subr.mxu0 0.0
    %1026 = vmatpush1.msra.mxu0 0.0
    %1027 = vmatprep.subr.mxu0 0.0
    %1028 = vmatpush1.msra.mxu0 0.0
    %1029 = vmatprep.subr.mxu0 0.0
    %1030 = vmatpush1.msra.mxu0 0.0
    %1031 = vmatprep.subr.mxu0 0.0
    %1032 = vmatpush1.msra.mxu0 0.0
    %1033 = vmatprep.subr.mxu0 0.0
    %1034 = vmatpush1.msra.mxu0 0.0
    %1035 = vmatprep.subr.mxu0 0.0
    %1036 = vmatpush1.msra.mxu0 0.0
    %1037 = vmatprep.subr.mxu0 0.0
    %1038 = vmatpush1.msra.mxu0 0.0
    %1039 = vmatprep.subr.mxu0 0.0
    %1040 = vmatpush1.msra.mxu0 0.0
    %1041 = vmatprep.subr.mxu0 0.0
    %1042 = vmatpush1.msra.mxu0 0.0
    %1043 = vmatprep.subr.mxu0 0.0
    %1044 = vmatpush1.msra.mxu0 0.0
    %1045 = vmatprep.subr.mxu0 0.0
    %1046 = vmatpush1.msra.mxu0 0.0
    %1047 = vmatprep.subr.mxu0 0.0
    %1048 = vmatpush1.msra.mxu0 0.0
    %1049 = vmatprep.subr.mxu0 0.0
    %1050 = vmatpush1.msra.mxu0 %v1011
    %1051 = vmatprep.subr.mxu0 0.0
    %1052 = vmatpush1.msra.mxu0 %v1010
    %1053 = vmatprep.subr.mxu0 0.0
    %1054 = vmatpush1.msra.mxu0 %v1009
    %1055 = vmatprep.subr.mxu0 0.0
    %1056 = vmatpush1.msra.mxu0 %v1008
    %1057 = vmatprep.subr.mxu0 0.0
    %1058 = vmatpush2.msra.mxu0 0.0
    %1059 = vmatprep.subr.mxu0 0.0
    %1060 = vmatpush2.msra.mxu0 0.0
    %1061 = vmatprep.subr.mxu0 0.0
    %1062 = vmatpush2.msra.mxu0 0.0
    %1063 = vmatprep.subr.mxu0 0.0
    %1064 = vmatpush2.msra.mxu0 0.0
    %1065 = vmatprep.subr.mxu0 0.0
    %1066 = vmatpush2.msra.mxu0 0.0
    %1067 = vmatprep.subr.mxu0 0.0
    %1068 = vmatpush2.msra.mxu0 0.0
    %1069 = vmatprep.subr.mxu0 0.0
    %1070 = vmatpush2.msra.mxu0 0.0
    %1071 = vmatprep.subr.mxu0 0.0
    %1072 = vmatpush2.msra.mxu0 0.0
    %1073 = vmatprep.subr.mxu0 0.0
    %1074 = vmatpush2.msra.mxu0 0.0
    %1075 = vmatprep.subr.mxu0 0.0
    %1076 = vmatpush2.msra.mxu0 0.0
    %1077 = vmatprep.subr.mxu0 0.0
    %1078 = vmatpush2.msra.mxu0 0.0
    %1079 = vmatprep.subr.mxu0 0.0
    %1080 = vmatpush2.msra.mxu0 0.0
    %1081 = vmatprep.subr.mxu0 0.0
    %1082 = vmatpush2.msra.mxu0 0.0
    %1083 = vmatprep.subr.mxu0 0.0
    %1084 = vmatpush2.msra.mxu0 0.0
    %1085 = vmatprep.subr.mxu0 0.0
    %1086 = vmatpush2.msra.mxu0 0.0
    %1087 = vmatprep.subr.mxu0 0.0
    %1088 = vmatpush2.msra.mxu0 0.0
    %1089 = vmatprep.mubr.f32.mxu0 0.0
    %1090 = vmatmul.mubr.f32.gmra.mxu0 %v1020
    %v1091 = vpop.f32.mrf.mxu0
    %v1092 = vadd.f32 %v1017, %v1091
    %v1093 = vpop.f32.mrf.mxu0
    %1094 = vmatprep.mubr.f32.mxu0 0.0
    %1095 = vmatmul.mubr.f32.gmra.mxu0 %v1023
    %v1096 = vpop.f32.mrf.mxu0
    %v1097 = vadd.f32 %v1017, %v1096
    %v1098 = vpop.f32.mrf.mxu0
    %1099 = vdwg.mxu0
    %v1100 = vld [vmem:[%s7] sm:$0xff]
    %v1101 = vld [vmem:[%s7 + $0x8] sm:$0xff]
    %v1102 = vld [vmem:[%s7 + $0x10] sm:$0xff]
    %v1103 = vld [vmem:[%s7 + $0x18] sm:$0xff]
    %v1104 = vld [vmem:[%s9] sm:$0x1]
    %v1106 = vrot.slane %v1005, 6
    %1107 = vrot.lane.b32.xlu0 %v1106, 96
    %v1108 = vpop.permute.xlu0 %1107
    %v1109 = vsel %vm55, %v1108, 0
    %1111 = vmatprep.subr.mxu0 0.0
    %1112 = vmatpush1.msra.mxu0 0.0
    %1113 = vmatprep.subr.mxu0 0.0
    %1114 = vmatpush1.msra.mxu0 0.0
    %1115 = vmatprep.subr.mxu0 0.0
    %1116 = vmatpush1.msra.mxu0 0.0
    %1117 = vmatprep.subr.mxu0 0.0
    %1118 = vmatpush1.msra.mxu0 0.0
    %1119 = vmatprep.subr.mxu0 0.0
    %1120 = vmatpush1.msra.mxu0 0.0
    %1121 = vmatprep.subr.mxu0 0.0
    %1122 = vmatpush1.msra.mxu0 0.0
    %1123 = vmatprep.subr.mxu0 0.0
    %1124 = vmatpush1.msra.mxu0 0.0
    %1125 = vmatprep.subr.mxu0 0.0
    %1126 = vmatpush1.msra.mxu0 0.0
    %1127 = vmatprep.subr.mxu0 0.0
    %1128 = vmatpush1.msra.mxu0 0.0
    %1129 = vmatprep.subr.mxu0 0.0
    %1130 = vmatpush1.msra.mxu0 0.0
    %1131 = vmatprep.subr.mxu0 0.0
    %1132 = vmatpush1.msra.mxu0 0.0
    %1133 = vmatprep.subr.mxu0 0.0
    %1134 = vmatpush1.msra.mxu0 0.0
    %1135 = vmatprep.subr.mxu0 0.0
    %1136 = vmatpush1.msra.mxu0 %v1103
    %1137 = vmatprep.subr.mxu0 0.0
    %1138 = vmatpush1.msra.mxu0 %v1102
    %1139 = vmatprep.subr.mxu0 0.0
    %1140 = vmatpush1.msra.mxu0 %v1101
    %1141 = vmatprep.subr.mxu0 0.0
    %1142 = vmatpush1.msra.mxu0 %v1100
    %1143 = vmatprep.subr.mxu0 0.0
    %1144 = vmatpush2.msra.mxu0 0.0
    %1145 = vmatprep.subr.mxu0 0.0
    %1146 = vmatpush2.msra.mxu0 0.0
    %1147 = vmatprep.subr.mxu0 0.0
    %1148 = vmatpush2.msra.mxu0 0.0
    %1149 = vmatprep.subr.mxu0 0.0
    %1150 = vmatpush2.msra.mxu0 0.0
    %1151 = vmatprep.subr.mxu0 0.0
    %1152 = vmatpush2.msra.mxu0 0.0
    %1153 = vmatprep.subr.mxu0 0.0
    %1154 = vmatpush2.msra.mxu0 0.0
    %1155 = vmatprep.subr.mxu0 0.0
    %1156 = vmatpush2.msra.mxu0 0.0
    %1157 = vmatprep.subr.mxu0 0.0
    %1158 = vmatpush2.msra.mxu0 0.0
    %1159 = vmatprep.subr.mxu0 0.0
    %1160 = vmatpush2.msra.mxu0 0.0
    %1161 = vmatprep.subr.mxu0 0.0
    %1162 = vmatpush2.msra.mxu0 0.0
    %1163 = vmatprep.subr.mxu0 0.0
    %1164 = vmatpush2.msra.mxu0 0.0
    %1165 = vmatprep.subr.mxu0 0.0
    %1166 = vmatpush2.msra.mxu0 0.0
    %1167 = vmatprep.subr.mxu0 0.0
    %1168 = vmatpush2.msra.mxu0 0.0
    %1169 = vmatprep.subr.mxu0 0.0
    %1170 = vmatpush2.msra.mxu0 0.0
    %1171 = vmatprep.subr.mxu0 0.0
    %1172 = vmatpush2.msra.mxu0 0.0
    %1173 = vmatprep.subr.mxu0 0.0
    %1174 = vmatpush2.msra.mxu0 0.0
    %1175 = vmatprep.mubr.f32.mxu0 0.0
    %1176 = vmatmul.mubr.f32.gmra.mxu0 %v1109
    %v1177 = vpop.f32.mrf.mxu0
    %v1178 = vadd.f32 0.0, %v1177
    %v1179 = vpop.f32.mrf.mxu0
    %1180 = vdwg.mxu0
    %v1181 = vadd.f32 %v1092, %v1178
    %v1182 = vxor.u32 %v1181, 2147483648
    %v1183 = vmul.f32 %v1182, 1.442695
    %v1184 = vpow.pop %v1183
    %v1185 = vadd.f32 %v1184, 1.0
    %v1186 = vrcp.pop %v1185
    %v1187 = vmul.f32 1.0, %v1186
    %v1189 = vlaneseq
    %v1190 = vshrl.u32 %v1189, 7
    %v1191 = vsub.s32 0, %v1190
    %v1192 = vrot.slane %v1104, %v1191
    %1193 = vrot.lane.b32.xlu0 %v1192, 64
    %v1194 = vpop.permute.xlu0 %1193
    %v1196 = vadd.f32 %v1178, %v1194
    %1198 = vrot.lane.b32.xlu0 %v1196, 64
    %v1199 = vpop.permute.xlu0 %1198
    %v1201 = vmul.f32 %v1187, %v1199
    %1203 = vrot.lane.b32.xlu0 %v1201, 64
    %v1204 = vpop.permute.xlu0 %1203
    %v1206 = vadd.f32 %v1092, %v1204
    %v1207 = vtanh.pop %v1206
    %v1208 = vsub.f32 1.0, %v1187
    %1210 = vrot.lane.b32.xlu0 %v1207, 96
    %v1211 = vpop.permute.xlu0 %1210
    %v1213 = vmul.f32 %v1208, %v1211
    %v1215 = vmul.f32 %v1187, %v1106
    %v1216 = vadd.f32 %v1213, %v1215
    %1218 = vrot.lane.b32.xlu0 %v1216, 96
    %v1219 = vpop.permute.xlu0 %1218
    %vm1221 = vcmask 253952
    %1222 = vst.msk [vmem:[#allocation2] sm:$0x1] %vm1221, %v1219
    %vm1223 = vcmask 254977
    %1224 = vst.msk [vmem:[#allocation2 + $0x7] sm:$0x2] %vm1223, %v1219
    %v1225 = vsel %vm55, %v1219, 0
    %1227 = vmatprep.subr.mxu0 0.0
    %1228 = vmatpush1.msra.mxu0 0.0
    %1229 = vmatprep.subr.mxu0 0.0
    %1230 = vmatpush1.msra.mxu0 0.0
    %1231 = vmatprep.subr.mxu0 0.0
    %1232 = vmatpush1.msra.mxu0 0.0
    %1233 = vmatprep.subr.mxu0 0.0
    %1234 = vmatpush1.msra.mxu0 0.0
    %1235 = vmatprep.subr.mxu0 0.0
    %1236 = vmatpush1.msra.mxu0 0.0
    %1237 = vmatprep.subr.mxu0 0.0
    %1238 = vmatpush1.msra.mxu0 0.0
    %1239 = vmatprep.subr.mxu0 0.0
    %1240 = vmatpush1.msra.mxu0 0.0
    %1241 = vmatprep.subr.mxu0 0.0
    %1242 = vmatpush1.msra.mxu0 0.0
    %1243 = vmatprep.subr.mxu0 0.0
    %1244 = vmatpush1.msra.mxu0 0.0
    %1245 = vmatprep.subr.mxu0 0.0
    %1246 = vmatpush1.msra.mxu0 0.0
    %1247 = vmatprep.subr.mxu0 0.0
    %1248 = vmatpush1.msra.mxu0 0.0
    %1249 = vmatprep.subr.mxu0 0.0
    %1250 = vmatpush1.msra.mxu0 0.0
    %1251 = vmatprep.subr.mxu0 0.0
    %1252 = vmatpush1.msra.mxu0 %v1103
    %1253 = vmatprep.subr.mxu0 0.0
    %1254 = vmatpush1.msra.mxu0 %v1102
    %1255 = vmatprep.subr.mxu0 0.0
    %1256 = vmatpush1.msra.mxu0 %v1101
    %1257 = vmatprep.subr.mxu0 0.0
    %1258 = vmatpush1.msra.mxu0 %v1100
    %1259 = vmatprep.subr.mxu0 0.0
    %1260 = vmatpush2.msra.mxu0 0.0
    %1261 = vmatprep.subr.mxu0 0.0
    %1262 = vmatpush2.msra.mxu0 0.0
    %1263 = vmatprep.subr.mxu0 0.0
    %1264 = vmatpush2.msra.mxu0 0.0
    %1265 = vmatprep.subr.mxu0 0.0
    %1266 = vmatpush2.msra.mxu0 0.0
    %1267 = vmatprep.subr.mxu0 0.0
    %1268 = vmatpush2.msra.mxu0 0.0
    %1269 = vmatprep.subr.mxu0 0.0
    %1270 = vmatpush2.msra.mxu0 0.0
    %1271 = vmatprep.subr.mxu0 0.0
    %1272 = vmatpush2.msra.mxu0 0.0
    %1273 = vmatprep.subr.mxu0 0.0
    %1274 = vmatpush2.msra.mxu0 0.0
    %1275 = vmatprep.subr.mxu0 0.0
    %1276 = vmatpush2.msra.mxu0 0.0
    %1277 = vmatprep.subr.mxu0 0.0
    %1278 = vmatpush2.msra.mxu0 0.0
    %1279 = vmatprep.subr.mxu0 0.0
    %1280 = vmatpush2.msra.mxu0 0.0
    %1281 = vmatprep.subr.mxu0 0.0
    %1282 = vmatpush2.msra.mxu0 0.0
    %1283 = vmatprep.subr.mxu0 0.0
    %1284 = vmatpush2.msra.mxu0 0.0
    %1285 = vmatprep.subr.mxu0 0.0
    %1286 = vmatpush2.msra.mxu0 0.0
    %1287 = vmatprep.subr.mxu0 0.0
    %1288 = vmatpush2.msra.mxu0 0.0
    %1289 = vmatprep.subr.mxu0 0.0
    %1290 = vmatpush2.msra.mxu0 0.0
    %1291 = vmatprep.mubr.f32.mxu0 0.0
    %1292 = vmatmul.mubr.f32.gmra.mxu0 %v1225
    %v1293 = vpop.f32.mrf.mxu0
    %v1294 = vadd.f32 0.0, %v1293
    %v1295 = vpop.f32.mrf.mxu0
    %1296 = vdwg.mxu0
    %v1298 = vrot.slane %v1294, 6
    %v1300 = vadd.f32 %v1092, %v1298
    %v1301 = vxor.u32 %v1300, 2147483648
    %v1302 = vmul.f32 %v1301, 1.442695
    %v1303 = vpow.pop %v1302
    %v1304 = vadd.f32 %v1303, 1.0
    %v1305 = vrcp.pop %v1304
    %v1306 = vmul.f32 1.0, %v1305
    %v1307 = vadd.f32 %v1294, %v1194
    %v1309 = vrot.slane %v1307, 6
    %1310 = vrot.lane.b32.xlu0 %v1309, 64
    %v1311 = vpop.permute.xlu0 %1310
    %v1313 = vmul.f32 %v1306, %v1311
    %1315 = vrot.lane.b32.xlu0 %v1313, 64
    %v1316 = vpop.permute.xlu0 %1315
    %v1318 = vadd.f32 %v1092, %v1316
    %v1319 = vtanh.pop %v1318
    %v1320 = vsub.f32 1.0, %v1306
    %1322 = vrot.lane.b32.xlu0 %v1319, 96
    %v1323 = vpop.permute.xlu0 %1322
    %v1325 = vmul.f32 %v1320, %v1323
    %v1326 = vrot.slane %v1216, 6
    %v1328 = vmul.f32 %v1306, %v1326
    %v1329 = vadd.f32 %v1325, %v1328
    %1331 = vrot.lane.b32.xlu0 %v1329, 96
    %v1332 = vpop.permute.xlu0 %1331
    %vm1334 = vcmask 256002
    %1335 = vst.msk [vmem:[#allocation2 - $0x1] sm:$0x4] %vm1334, %v1332
    %vm1336 = vcmask 257027
    %1337 = vst.msk [vmem:[#allocation2 + $0x6] sm:$0x8] %vm1336, %v1332
    %v1338 = vrot.slane %v1329, 2
    %1339 = vrot.lane.b32.xlu0 %v1338, 96
    %v1340 = vpop.permute.xlu0 %1339
    %v1341 = vsel %vm55, %v1340, 0
    %1343 = vmatprep.subr.mxu0 0.0
    %1344 = vmatpush1.msra.mxu0 0.0
    %1345 = vmatprep.subr.mxu0 0.0
    %1346 = vmatpush1.msra.mxu0 0.0
    %1347 = vmatprep.subr.mxu0 0.0
    %1348 = vmatpush1.msra.mxu0 0.0
    %1349 = vmatprep.subr.mxu0 0.0
    %1350 = vmatpush1.msra.mxu0 0.0
    %1351 = vmatprep.subr.mxu0 0.0
    %1352 = vmatpush1.msra.mxu0 0.0
    %1353 = vmatprep.subr.mxu0 0.0
    %1354 = vmatpush1.msra.mxu0 0.0
    %1355 = vmatprep.subr.mxu0 0.0
    %1356 = vmatpush1.msra.mxu0 0.0
    %1357 = vmatprep.subr.mxu0 0.0
    %1358 = vmatpush1.msra.mxu0 0.0
    %1359 = vmatprep.subr.mxu0 0.0
    %1360 = vmatpush1.msra.mxu0 0.0
    %1361 = vmatprep.subr.mxu0 0.0
    %1362 = vmatpush1.msra.mxu0 0.0
    %1363 = vmatprep.subr.mxu0 0.0
    %1364 = vmatpush1.msra.mxu0 0.0
    %1365 = vmatprep.subr.mxu0 0.0
    %1366 = vmatpush1.msra.mxu0 0.0
    %1367 = vmatprep.subr.mxu0 0.0
    %1368 = vmatpush1.msra.mxu0 %v1103
    %1369 = vmatprep.subr.mxu0 0.0
    %1370 = vmatpush1.msra.mxu0 %v1102
    %1371 = vmatprep.subr.mxu0 0.0
    %1372 = vmatpush1.msra.mxu0 %v1101
    %1373 = vmatprep.subr.mxu0 0.0
    %1374 = vmatpush1.msra.mxu0 %v1100
    %1375 = vmatprep.subr.mxu0 0.0
    %1376 = vmatpush2.msra.mxu0 0.0
    %1377 = vmatprep.subr.mxu0 0.0
    %1378 = vmatpush2.msra.mxu0 0.0
    %1379 = vmatprep.subr.mxu0 0.0
    %1380 = vmatpush2.msra.mxu0 0.0
    %1381 = vmatprep.subr.mxu0 0.0
    %1382 = vmatpush2.msra.mxu0 0.0
    %1383 = vmatprep.subr.mxu0 0.0
    %1384 = vmatpush2.msra.mxu0 0.0
    %1385 = vmatprep.subr.mxu0 0.0
    %1386 = vmatpush2.msra.mxu0 0.0
    %1387 = vmatprep.subr.mxu0 0.0
    %1388 = vmatpush2.msra.mxu0 0.0
    %1389 = vmatprep.subr.mxu0 0.0
    %1390 = vmatpush2.msra.mxu0 0.0
    %1391 = vmatprep.subr.mxu0 0.0
    %1392 = vmatpush2.msra.mxu0 0.0
    %1393 = vmatprep.subr.mxu0 0.0
    %1394 = vmatpush2.msra.mxu0 0.0
    %1395 = vmatprep.subr.mxu0 0.0
    %1396 = vmatpush2.msra.mxu0 0.0
    %1397 = vmatprep.subr.mxu0 0.0
    %1398 = vmatpush2.msra.mxu0 0.0
    %1399 = vmatprep.subr.mxu0 0.0
    %1400 = vmatpush2.msra.mxu0 0.0
    %1401 = vmatprep.subr.mxu0 0.0
    %1402 = vmatpush2.msra.mxu0 0.0
    %1403 = vmatprep.subr.mxu0 0.0
    %1404 = vmatpush2.msra.mxu0 0.0
    %1405 = vmatprep.subr.mxu0 0.0
    %1406 = vmatpush2.msra.mxu0 0.0
    %1407 = vmatprep.mubr.f32.mxu0 0.0
    %1408 = vmatmul.mubr.f32.gmra.mxu0 %v1341
    %v1409 = vpop.f32.mrf.mxu0
    %v1410 = vadd.f32 0.0, %v1409
    %v1411 = vpop.f32.mrf.mxu0
    %1412 = vdwg.mxu0
    %v1414 = vrot.slane %v1410, 4
    %v1416 = vadd.f32 %v1092, %v1414
    %v1417 = vxor.u32 %v1416, 2147483648
    %v1418 = vmul.f32 %v1417, 1.442695
    %v1419 = vpow.pop %v1418
    %v1420 = vadd.f32 %v1419, 1.0
    %v1421 = vrcp.pop %v1420
    %v1422 = vmul.f32 1.0, %v1421
    %v1423 = vadd.f32 %v1410, %v1194
    %v1425 = vrot.slane %v1423, 4
    %1426 = vrot.lane.b32.xlu0 %v1425, 64
    %v1427 = vpop.permute.xlu0 %1426
    %v1429 = vmul.f32 %v1422, %v1427
    %1431 = vrot.lane.b32.xlu0 %v1429, 64
    %v1432 = vpop.permute.xlu0 %1431
    %v1434 = vadd.f32 %v1092, %v1432
    %v1435 = vtanh.pop %v1434
    %v1436 = vsub.f32 1.0, %v1422
    %1438 = vrot.lane.b32.xlu0 %v1435, 96
    %v1439 = vpop.permute.xlu0 %1438
    %v1441 = vmul.f32 %v1436, %v1439
    %v1442 = vrot.slane %v1329, 6
    %v1444 = vmul.f32 %v1422, %v1442
    %v1445 = vadd.f32 %v1441, %v1444
    %1447 = vrot.lane.b32.xlu0 %v1445, 96
    %v1448 = vpop.permute.xlu0 %1447
    %vm1450 = vcmask 258052
    %1451 = vst.msk [vmem:[#allocation2 - $0x2] sm:$0x10] %vm1450, %v1448
    %vm1452 = vcmask 259077
    %1453 = vst.msk [vmem:[#allocation2 + $0x5] sm:$0x20] %vm1452, %v1448
    %v1454 = vrot.slane %v1445, 4
    %1455 = vrot.lane.b32.xlu0 %v1454, 96
    %v1456 = vpop.permute.xlu0 %1455
    %v1457 = vsel %vm55, %v1456, 0
    %1459 = vmatprep.subr.mxu0 0.0
    %1460 = vmatpush1.msra.mxu0 0.0
    %1461 = vmatprep.subr.mxu0 0.0
    %1462 = vmatpush1.msra.mxu0 0.0
    %1463 = vmatprep.subr.mxu0 0.0
    %1464 = vmatpush1.msra.mxu0 0.0
    %1465 = vmatprep.subr.mxu0 0.0
    %1466 = vmatpush1.msra.mxu0 0.0
    %1467 = vmatprep.subr.mxu0 0.0
    %1468 = vmatpush1.msra.mxu0 0.0
    %1469 = vmatprep.subr.mxu0 0.0
    %1470 = vmatpush1.msra.mxu0 0.0
    %1471 = vmatprep.subr.mxu0 0.0
    %1472 = vmatpush1.msra.mxu0 0.0
    %1473 = vmatprep.subr.mxu0 0.0
    %1474 = vmatpush1.msra.mxu0 0.0
    %1475 = vmatprep.subr.mxu0 0.0
    %1476 = vmatpush1.msra.mxu0 0.0
    %1477 = vmatprep.subr.mxu0 0.0
    %1478 = vmatpush1.msra.mxu0 0.0
    %1479 = vmatprep.subr.mxu0 0.0
    %1480 = vmatpush1.msra.mxu0 0.0
    %1481 = vmatprep.subr.mxu0 0.0
    %1482 = vmatpush1.msra.mxu0 0.0
    %1483 = vmatprep.subr.mxu0 0.0
    %1484 = vmatpush1.msra.mxu0 %v1103
    %1485 = vmatprep.subr.mxu0 0.0
    %1486 = vmatpush1.msra.mxu0 %v1102
    %1487 = vmatprep.subr.mxu0 0.0
    %1488 = vmatpush1.msra.mxu0 %v1101
    %1489 = vmatprep.subr.mxu0 0.0
    %1490 = vmatpush1.msra.mxu0 %v1100
    %1491 = vmatprep.subr.mxu0 0.0
    %1492 = vmatpush2.msra.mxu0 0.0
    %1493 = vmatprep.subr.mxu0 0.0
    %1494 = vmatpush2.msra.mxu0 0.0
    %1495 = vmatprep.subr.mxu0 0.0
    %1496 = vmatpush2.msra.mxu0 0.0
    %1497 = vmatprep.subr.mxu0 0.0
    %1498 = vmatpush2.msra.mxu0 0.0
    %1499 = vmatprep.subr.mxu0 0.0
    %1500 = vmatpush2.msra.mxu0 0.0
    %1501 = vmatprep.subr.mxu0 0.0
    %1502 = vmatpush2.msra.mxu0 0.0
    %1503 = vmatprep.subr.mxu0 0.0
    %1504 = vmatpush2.msra.mxu0 0.0
    %1505 = vmatprep.subr.mxu0 0.0
    %1506 = vmatpush2.msra.mxu0 0.0
    %1507 = vmatprep.subr.mxu0 0.0
    %1508 = vmatpush2.msra.mxu0 0.0
    %1509 = vmatprep.subr.mxu0 0.0
    %1510 = vmatpush2.msra.mxu0 0.0
    %1511 = vmatprep.subr.mxu0 0.0
    %1512 = vmatpush2.msra.mxu0 0.0
    %1513 = vmatprep.subr.mxu0 0.0
    %1514 = vmatpush2.msra.mxu0 0.0
    %1515 = vmatprep.subr.mxu0 0.0
    %1516 = vmatpush2.msra.mxu0 0.0
    %1517 = vmatprep.subr.mxu0 0.0
    %1518 = vmatpush2.msra.mxu0 0.0
    %1519 = vmatprep.subr.mxu0 0.0
    %1520 = vmatpush2.msra.mxu0 0.0
    %1521 = vmatprep.subr.mxu0 0.0
    %1522 = vmatpush2.msra.mxu0 0.0
    %1523 = vmatprep.mubr.f32.mxu0 0.0
    %1524 = vmatmul.mubr.f32.gmra.mxu0 %v1457
    %v1525 = vpop.f32.mrf.mxu0
    %v1526 = vadd.f32 0.0, %v1525
    %v1527 = vpop.f32.mrf.mxu0
    %1528 = vdwg.mxu0
    %v1530 = vrot.slane %v1526, 2
    %v1532 = vadd.f32 %v1092, %v1530
    %v1533 = vxor.u32 %v1532, 2147483648
    %v1534 = vmul.f32 %v1533, 1.442695
    %v1535 = vpow.pop %v1534
    %v1536 = vadd.f32 %v1535, 1.0
    %v1537 = vrcp.pop %v1536
    %v1538 = vmul.f32 1.0, %v1537
    %v1539 = vadd.f32 %v1526, %v1194
    %v1541 = vrot.slane %v1539, 2
    %1542 = vrot.lane.b32.xlu0 %v1541, 64
    %v1543 = vpop.permute.xlu0 %1542
    %v1545 = vmul.f32 %v1538, %v1543
    %1547 = vrot.lane.b32.xlu0 %v1545, 64
    %v1548 = vpop.permute.xlu0 %1547
    %v1550 = vadd.f32 %v1092, %v1548
    %v1551 = vtanh.pop %v1550
    %v1552 = vsub.f32 1.0, %v1538
    %1554 = vrot.lane.b32.xlu0 %v1551, 96
    %v1555 = vpop.permute.xlu0 %1554
    %v1557 = vmul.f32 %v1552, %v1555
    %v1558 = vrot.slane %v1445, 6
    %v1560 = vmul.f32 %v1538, %v1558
    %v1561 = vadd.f32 %v1557, %v1560
    %1563 = vrot.lane.b32.xlu0 %v1561, 96
    %v1564 = vpop.permute.xlu0 %1563
    %vm1566 = vcmask 260102
    %1567 = vst.msk [vmem:[#allocation2 - $0x3] sm:$0x40] %vm1566, %v1564
    %vm1568 = vcmask 261127
    %1569 = vst.msk [vmem:[#allocation2 + $0x4] sm:$0x80] %vm1568, %v1564
    %v1570 = vrot.slane %v1561, 6
    %1571 = vrot.lane.b32.xlu0 %v1570, 96
    %v1572 = vpop.permute.xlu0 %1571
    %v1573 = vsel %vm55, %v1572, 0
    %1575 = vmatprep.subr.mxu0 0.0
    %1576 = vmatpush1.msra.mxu0 0.0
    %1577 = vmatprep.subr.mxu0 0.0
    %1578 = vmatpush1.msra.mxu0 0.0
    %1579 = vmatprep.subr.mxu0 0.0
    %1580 = vmatpush1.msra.mxu0 0.0
    %1581 = vmatprep.subr.mxu0 0.0
    %1582 = vmatpush1.msra.mxu0 0.0
    %1583 = vmatprep.subr.mxu0 0.0
    %1584 = vmatpush1.msra.mxu0 0.0
    %1585 = vmatprep.subr.mxu0 0.0
    %1586 = vmatpush1.msra.mxu0 0.0
    %1587 = vmatprep.subr.mxu0 0.0
    %1588 = vmatpush1.msra.mxu0 0.0
    %1589 = vmatprep.subr.mxu0 0.0
    %1590 = vmatpush1.msra.mxu0 0.0
    %1591 = vmatprep.subr.mxu0 0.0
    %1592 = vmatpush1.msra.mxu0 0.0
    %1593 = vmatprep.subr.mxu0 0.0
    %1594 = vmatpush1.msra.mxu0 0.0
    %1595 = vmatprep.subr.mxu0 0.0
    %1596 = vmatpush1.msra.mxu0 0.0
    %1597 = vmatprep.subr.mxu0 0.0
    %1598 = vmatpush1.msra.mxu0 0.0
    %1599 = vmatprep.subr.mxu0 0.0
    %1600 = vmatpush1.msra.mxu0 %v1103
    %1601 = vmatprep.subr.mxu0 0.0
    %1602 = vmatpush1.msra.mxu0 %v1102
    %1603 = vmatprep.subr.mxu0 0.0
    %1604 = vmatpush1.msra.mxu0 %v1101
    %1605 = vmatprep.subr.mxu0 0.0
    %1606 = vmatpush1.msra.mxu0 %v1100
    %1607 = vmatprep.subr.mxu0 0.0
    %1608 = vmatpush2.msra.mxu0 0.0
    %1609 = vmatprep.subr.mxu0 0.0
    %1610 = vmatpush2.msra.mxu0 0.0
    %1611 = vmatprep.subr.mxu0 0.0
    %1612 = vmatpush2.msra.mxu0 0.0
    %1613 = vmatprep.subr.mxu0 0.0
    %1614 = vmatpush2.msra.mxu0 0.0
    %1615 = vmatprep.subr.mxu0 0.0
    %1616 = vmatpush2.msra.mxu0 0.0
    %1617 = vmatprep.subr.mxu0 0.0
    %1618 = vmatpush2.msra.mxu0 0.0
    %1619 = vmatprep.subr.mxu0 0.0
    %1620 = vmatpush2.msra.mxu0 0.0
    %1621 = vmatprep.subr.mxu0 0.0
    %1622 = vmatpush2.msra.mxu0 0.0
    %1623 = vmatprep.subr.mxu0 0.0
    %1624 = vmatpush2.msra.mxu0 0.0
    %1625 = vmatprep.subr.mxu0 0.0
    %1626 = vmatpush2.msra.mxu0 0.0
    %1627 = vmatprep.subr.mxu0 0.0
    %1628 = vmatpush2.msra.mxu0 0.0
    %1629 = vmatprep.subr.mxu0 0.0
    %1630 = vmatpush2.msra.mxu0 0.0
    %1631 = vmatprep.subr.mxu0 0.0
    %1632 = vmatpush2.msra.mxu0 0.0
    %1633 = vmatprep.subr.mxu0 0.0
    %1634 = vmatpush2.msra.mxu0 0.0
    %1635 = vmatprep.subr.mxu0 0.0
    %1636 = vmatpush2.msra.mxu0 0.0
    %1637 = vmatprep.subr.mxu0 0.0
    %1638 = vmatpush2.msra.mxu0 0.0
    %1639 = vmatprep.mubr.f32.mxu0 0.0
    %1640 = vmatmul.mubr.f32.gmra.mxu0 %v1573
    %v1641 = vpop.f32.mrf.mxu0
    %v1642 = vadd.f32 0.0, %v1641
    %v1643 = vpop.f32.mrf.mxu0
    %1644 = vdwg.mxu0
    %v1645 = vadd.f32 %v1097, %v1642
    %v1646 = vxor.u32 %v1645, 2147483648
    %v1647 = vmul.f32 %v1646, 1.442695
    %v1648 = vpow.pop %v1647
    %v1649 = vadd.f32 %v1648, 1.0
    %v1650 = vrcp.pop %v1649
    %v1651 = vmul.f32 1.0, %v1650
    %v1652 = vadd.f32 %v1642, %v1194
    %1654 = vrot.lane.b32.xlu0 %v1652, 64
    %v1655 = vpop.permute.xlu0 %1654
    %v1657 = vmul.f32 %v1651, %v1655
    %1659 = vrot.lane.b32.xlu0 %v1657, 64
    %v1660 = vpop.permute.xlu0 %1659
    %v1662 = vadd.f32 %v1097, %v1660
    %v1663 = vtanh.pop %v1662
    %v1664 = vsub.f32 1.0, %v1651
    %1666 = vrot.lane.b32.xlu0 %v1663, 96
    %v1667 = vpop.permute.xlu0 %1666
    %v1669 = vmul.f32 %v1664, %v1667
    %v1671 = vmul.f32 %v1651, %v1570
    %v1672 = vadd.f32 %v1669, %v1671
    %1674 = vrot.lane.b32.xlu0 %v1672, 96
    %v1675 = vpop.permute.xlu0 %1674
    %1677 = vst.msk [vmem:[#allocation2 + $0x4] sm:$0x1] %vm1221, %v1675
    %1678 = vst.msk [vmem:[#allocation2 + $0xb] sm:$0x2] %vm1223, %v1675
    %v1679 = vsel %vm55, %v1675, 0
    %1681 = vmatprep.subr.mxu0 0.0
    %1682 = vmatpush1.msra.mxu0 0.0
    %1683 = vmatprep.subr.mxu0 0.0
    %1684 = vmatpush1.msra.mxu0 0.0
    %1685 = vmatprep.subr.mxu0 0.0
    %1686 = vmatpush1.msra.mxu0 0.0
    %1687 = vmatprep.subr.mxu0 0.0
    %1688 = vmatpush1.msra.mxu0 0.0
    %1689 = vmatprep.subr.mxu0 0.0
    %1690 = vmatpush1.msra.mxu0 0.0
    %1691 = vmatprep.subr.mxu0 0.0
    %1692 = vmatpush1.msra.mxu0 0.0
    %1693 = vmatprep.subr.mxu0 0.0
    %1694 = vmatpush1.msra.mxu0 0.0
    %1695 = vmatprep.subr.mxu0 0.0
    %1696 = vmatpush1.msra.mxu0 0.0
    %1697 = vmatprep.subr.mxu0 0.0
    %1698 = vmatpush1.msra.mxu0 0.0
    %1699 = vmatprep.subr.mxu0 0.0
    %1700 = vmatpush1.msra.mxu0 0.0
    %1701 = vmatprep.subr.mxu0 0.0
    %1702 = vmatpush1.msra.mxu0 0.0
    %1703 = vmatprep.subr.mxu0 0.0
    %1704 = vmatpush1.msra.mxu0 0.0
    %1705 = vmatprep.subr.mxu0 0.0
    %1706 = vmatpush1.msra.mxu0 %v1103
    %1707 = vmatprep.subr.mxu0 0.0
    %1708 = vmatpush1.msra.mxu0 %v1102
    %1709 = vmatprep.subr.mxu0 0.0
    %1710 = vmatpush1.msra.mxu0 %v1101
    %1711 = vmatprep.subr.mxu0 0.0
    %1712 = vmatpush1.msra.mxu0 %v1100
    %1713 = vmatprep.subr.mxu0 0.0
    %1714 = vmatpush2.msra.mxu0 0.0
    %1715 = vmatprep.subr.mxu0 0.0
    %1716 = vmatpush2.msra.mxu0 0.0
    %1717 = vmatprep.subr.mxu0 0.0
    %1718 = vmatpush2.msra.mxu0 0.0
    %1719 = vmatprep.subr.mxu0 0.0
    %1720 = vmatpush2.msra.mxu0 0.0
    %1721 = vmatprep.subr.mxu0 0.0
    %1722 = vmatpush2.msra.mxu0 0.0
    %1723 = vmatprep.subr.mxu0 0.0
    %1724 = vmatpush2.msra.mxu0 0.0
    %1725 = vmatprep.subr.mxu0 0.0
    %1726 = vmatpush2.msra.mxu0 0.0
    %1727 = vmatprep.subr.mxu0 0.0
    %1728 = vmatpush2.msra.mxu0 0.0
    %1729 = vmatprep.subr.mxu0 0.0
    %1730 = vmatpush2.msra.mxu0 0.0
    %1731 = vmatprep.subr.mxu0 0.0
    %1732 = vmatpush2.msra.mxu0 0.0
    %1733 = vmatprep.subr.mxu0 0.0
    %1734 = vmatpush2.msra.mxu0 0.0
    %1735 = vmatprep.subr.mxu0 0.0
    %1736 = vmatpush2.msra.mxu0 0.0
    %1737 = vmatprep.subr.mxu0 0.0
    %1738 = vmatpush2.msra.mxu0 0.0
    %1739 = vmatprep.subr.mxu0 0.0
    %1740 = vmatpush2.msra.mxu0 0.0
    %1741 = vmatprep.subr.mxu0 0.0
    %1742 = vmatpush2.msra.mxu0 0.0
    %1743 = vmatprep.subr.mxu0 0.0
    %1744 = vmatpush2.msra.mxu0 0.0
    %1745 = vmatprep.mubr.f32.mxu0 0.0
    %1746 = vmatmul.mubr.f32.gmra.mxu0 %v1679
    %v1747 = vpop.f32.mrf.mxu0
    %v1748 = vadd.f32 0.0, %v1747
    %v1749 = vpop.f32.mrf.mxu0
    %1750 = vdwg.mxu0
    %v1752 = vrot.slane %v1748, 6
    %v1754 = vadd.f32 %v1097, %v1752
    %v1755 = vxor.u32 %v1754, 2147483648
    %v1756 = vmul.f32 %v1755, 1.442695
    %v1757 = vpow.pop %v1756
    %v1758 = vadd.f32 %v1757, 1.0
    %v1759 = vrcp.pop %v1758
    %v1760 = vmul.f32 1.0, %v1759
    %v1761 = vadd.f32 %v1748, %v1194
    %v1763 = vrot.slane %v1761, 6
    %1764 = vrot.lane.b32.xlu0 %v1763, 64
    %v1765 = vpop.permute.xlu0 %1764
    %v1767 = vmul.f32 %v1760, %v1765
    %1769 = vrot.lane.b32.xlu0 %v1767, 64
    %v1770 = vpop.permute.xlu0 %1769
    %v1772 = vadd.f32 %v1097, %v1770
    %v1773 = vtanh.pop %v1772
    %v1774 = vsub.f32 1.0, %v1760
    %1776 = vrot.lane.b32.xlu0 %v1773, 96
    %v1777 = vpop.permute.xlu0 %1776
    %v1779 = vmul.f32 %v1774, %v1777
    %v1780 = vrot.slane %v1672, 6
    %v1782 = vmul.f32 %v1760, %v1780
    %v1783 = vadd.f32 %v1779, %v1782
    %1785 = vrot.lane.b32.xlu0 %v1783, 96
    %v1786 = vpop.permute.xlu0 %1785
    %1788 = vst.msk [vmem:[#allocation2 + $0x3] sm:$0x4] %vm1334, %v1786
    %1789 = vst.msk [vmem:[#allocation2 + $0xa] sm:$0x8] %vm1336, %v1786
    %v1790 = vrot.slane %v1783, 2
    %1791 = vrot.lane.b32.xlu0 %v1790, 96
    %v1792 = vpop.permute.xlu0 %1791
    %v1793 = vsel %vm55, %v1792, 0
    %1795 = vmatprep.subr.mxu0 0.0
    %1796 = vmatpush1.msra.mxu0 0.0
    %1797 = vmatprep.subr.mxu0 0.0
    %1798 = vmatpush1.msra.mxu0 0.0
    %1799 = vmatprep.subr.mxu0 0.0
    %1800 = vmatpush1.msra.mxu0 0.0
    %1801 = vmatprep.subr.mxu0 0.0
    %1802 = vmatpush1.msra.mxu0 0.0
    %1803 = vmatprep.subr.mxu0 0.0
    %1804 = vmatpush1.msra.mxu0 0.0
    %1805 = vmatprep.subr.mxu0 0.0
    %1806 = vmatpush1.msra.mxu0 0.0
    %1807 = vmatprep.subr.mxu0 0.0
    %1808 = vmatpush1.msra.mxu0 0.0
    %1809 = vmatprep.subr.mxu0 0.0
    %1810 = vmatpush1.msra.mxu0 0.0
    %1811 = vmatprep.subr.mxu0 0.0
    %1812 = vmatpush1.msra.mxu0 0.0
    %1813 = vmatprep.subr.mxu0 0.0
    %1814 = vmatpush1.msra.mxu0 0.0
    %1815 = vmatprep.subr.mxu0 0.0
    %1816 = vmatpush1.msra.mxu0 0.0
    %1817 = vmatprep.subr.mxu0 0.0
    %1818 = vmatpush1.msra.mxu0 0.0
    %1819 = vmatprep.subr.mxu0 0.0
    %1820 = vmatpush1.msra.mxu0 %v1103
    %1821 = vmatprep.subr.mxu0 0.0
    %1822 = vmatpush1.msra.mxu0 %v1102
    %1823 = vmatprep.subr.mxu0 0.0
    %1824 = vmatpush1.msra.mxu0 %v1101
    %1825 = vmatprep.subr.mxu0 0.0
    %1826 = vmatpush1.msra.mxu0 %v1100
    %1827 = vmatprep.subr.mxu0 0.0
    %1828 = vmatpush2.msra.mxu0 0.0
    %1829 = vmatprep.subr.mxu0 0.0
    %1830 = vmatpush2.msra.mxu0 0.0
    %1831 = vmatprep.subr.mxu0 0.0
    %1832 = vmatpush2.msra.mxu0 0.0
    %1833 = vmatprep.subr.mxu0 0.0
    %1834 = vmatpush2.msra.mxu0 0.0
    %1835 = vmatprep.subr.mxu0 0.0
    %1836 = vmatpush2.msra.mxu0 0.0
    %1837 = vmatprep.subr.mxu0 0.0
    %1838 = vmatpush2.msra.mxu0 0.0
    %1839 = vmatprep.subr.mxu0 0.0
    %1840 = vmatpush2.msra.mxu0 0.0
    %1841 = vmatprep.subr.mxu0 0.0
    %1842 = vmatpush2.msra.mxu0 0.0
    %1843 = vmatprep.subr.mxu0 0.0
    %1844 = vmatpush2.msra.mxu0 0.0
    %1845 = vmatprep.subr.mxu0 0.0
    %1846 = vmatpush2.msra.mxu0 0.0
    %1847 = vmatprep.subr.mxu0 0.0
    %1848 = vmatpush2.msra.mxu0 0.0
    %1849 = vmatprep.subr.mxu0 0.0
    %1850 = vmatpush2.msra.mxu0 0.0
    %1851 = vmatprep.subr.mxu0 0.0
    %1852 = vmatpush2.msra.mxu0 0.0
    %1853 = vmatprep.subr.mxu0 0.0
    %1854 = vmatpush2.msra.mxu0 0.0
    %1855 = vmatprep.subr.mxu0 0.0
    %1856 = vmatpush2.msra.mxu0 0.0
    %1857 = vmatprep.subr.mxu0 0.0
    %1858 = vmatpush2.msra.mxu0 0.0
    %1859 = vmatprep.mubr.f32.mxu0 0.0
    %1860 = vmatmul.mubr.f32.gmra.mxu0 %v1793
    %v1861 = vpop.f32.mrf.mxu0
    %v1862 = vadd.f32 0.0, %v1861
    %v1863 = vpop.f32.mrf.mxu0
    %1864 = vdwg.mxu0
    %v1866 = vrot.slane %v1862, 4
    %v1868 = vadd.f32 %v1097, %v1866
    %v1869 = vxor.u32 %v1868, 2147483648
    %v1870 = vmul.f32 %v1869, 1.442695
    %v1871 = vpow.pop %v1870
    %v1872 = vadd.f32 %v1871, 1.0
    %v1873 = vrcp.pop %v1872
    %v1874 = vmul.f32 1.0, %v1873
    %v1875 = vadd.f32 %v1862, %v1194
    %v1877 = vrot.slane %v1875, 4
    %1878 = vrot.lane.b32.xlu0 %v1877, 64
    %v1879 = vpop.permute.xlu0 %1878
    %v1881 = vmul.f32 %v1874, %v1879
    %1883 = vrot.lane.b32.xlu0 %v1881, 64
    %v1884 = vpop.permute.xlu0 %1883
    %v1886 = vadd.f32 %v1097, %v1884
    %v1887 = vtanh.pop %v1886
    %v1888 = vsub.f32 1.0, %v1874
    %1890 = vrot.lane.b32.xlu0 %v1887, 96
    %v1891 = vpop.permute.xlu0 %1890
    %v1893 = vmul.f32 %v1888, %v1891
    %v1894 = vrot.slane %v1783, 6
    %v1896 = vmul.f32 %v1874, %v1894
    %v1897 = vadd.f32 %v1893, %v1896
    %1899 = vrot.lane.b32.xlu0 %v1897, 96
    %v1900 = vpop.permute.xlu0 %1899
    %1902 = vst.msk [vmem:[#allocation2 + $0x2] sm:$0x10] %vm1450, %v1900
    %1903 = vst.msk [vmem:[#allocation2 + $0x9] sm:$0x20] %vm1452, %v1900
    %v1904 = vrot.slane %v1897, 4
    %1905 = vrot.lane.b32.xlu0 %v1904, 96
    %v1906 = vpop.permute.xlu0 %1905
    %v1907 = vsel %vm55, %v1906, 0
    %1909 = vmatprep.subr.mxu0 0.0
    %1910 = vmatpush1.msra.mxu0 0.0
    %1911 = vmatprep.subr.mxu0 0.0
    %1912 = vmatpush1.msra.mxu0 0.0
    %1913 = vmatprep.subr.mxu0 0.0
    %1914 = vmatpush1.msra.mxu0 0.0
    %1915 = vmatprep.subr.mxu0 0.0
    %1916 = vmatpush1.msra.mxu0 0.0
    %1917 = vmatprep.subr.mxu0 0.0
    %1918 = vmatpush1.msra.mxu0 0.0
    %1919 = vmatprep.subr.mxu0 0.0
    %1920 = vmatpush1.msra.mxu0 0.0
    %1921 = vmatprep.subr.mxu0 0.0
    %1922 = vmatpush1.msra.mxu0 0.0
    %1923 = vmatprep.subr.mxu0 0.0
    %1924 = vmatpush1.msra.mxu0 0.0
    %1925 = vmatprep.subr.mxu0 0.0
    %1926 = vmatpush1.msra.mxu0 0.0
    %1927 = vmatprep.subr.mxu0 0.0
    %1928 = vmatpush1.msra.mxu0 0.0
    %1929 = vmatprep.subr.mxu0 0.0
    %1930 = vmatpush1.msra.mxu0 0.0
    %1931 = vmatprep.subr.mxu0 0.0
    %1932 = vmatpush1.msra.mxu0 0.0
    %1933 = vmatprep.subr.mxu0 0.0
    %1934 = vmatpush1.msra.mxu0 %v1103
    %1935 = vmatprep.subr.mxu0 0.0
    %1936 = vmatpush1.msra.mxu0 %v1102
    %1937 = vmatprep.subr.mxu0 0.0
    %1938 = vmatpush1.msra.mxu0 %v1101
    %1939 = vmatprep.subr.mxu0 0.0
    %1940 = vmatpush1.msra.mxu0 %v1100
    %1941 = vmatprep.subr.mxu0 0.0
    %1942 = vmatpush2.msra.mxu0 0.0
    %1943 = vmatprep.subr.mxu0 0.0
    %1944 = vmatpush2.msra.mxu0 0.0
    %1945 = vmatprep.subr.mxu0 0.0
    %1946 = vmatpush2.msra.mxu0 0.0
    %1947 = vmatprep.subr.mxu0 0.0
    %1948 = vmatpush2.msra.mxu0 0.0
    %1949 = vmatprep.subr.mxu0 0.0
    %1950 = vmatpush2.msra.mxu0 0.0
    %1951 = vmatprep.subr.mxu0 0.0
    %1952 = vmatpush2.msra.mxu0 0.0
    %1953 = vmatprep.subr.mxu0 0.0
    %1954 = vmatpush2.msra.mxu0 0.0
    %1955 = vmatprep.subr.mxu0 0.0
    %1956 = vmatpush2.msra.mxu0 0.0
    %1957 = vmatprep.subr.mxu0 0.0
    %1958 = vmatpush2.msra.mxu0 0.0
    %1959 = vmatprep.subr.mxu0 0.0
    %1960 = vmatpush2.msra.mxu0 0.0
    %1961 = vmatprep.subr.mxu0 0.0
    %1962 = vmatpush2.msra.mxu0 0.0
    %1963 = vmatprep.subr.mxu0 0.0
    %1964 = vmatpush2.msra.mxu0 0.0
    %1965 = vmatprep.subr.mxu0 0.0
    %1966 = vmatpush2.msra.mxu0 0.0
    %1967 = vmatprep.subr.mxu0 0.0
    %1968 = vmatpush2.msra.mxu0 0.0
    %1969 = vmatprep.subr.mxu0 0.0
    %1970 = vmatpush2.msra.mxu0 0.0
    %1971 = vmatprep.subr.mxu0 0.0
    %1972 = vmatpush2.msra.mxu0 0.0
    %1973 = vmatprep.mubr.f32.mxu0 0.0
    %1974 = vmatmul.mubr.f32.gmra.mxu0 %v1907
    %v1975 = vpop.f32.mrf.mxu0
    %v1976 = vadd.f32 0.0, %v1975
    %v1977 = vpop.f32.mrf.mxu0
    %1978 = vdwg.mxu0
    %v1980 = vrot.slane %v1976, 2
    %v1982 = vadd.f32 %v1097, %v1980
    %v1983 = vxor.u32 %v1982, 2147483648
    %v1984 = vmul.f32 %v1983, 1.442695
    %v1985 = vpow.pop %v1984
    %v1986 = vadd.f32 %v1985, 1.0
    %v1987 = vrcp.pop %v1986
    %v1988 = vmul.f32 1.0, %v1987
    %v1989 = vadd.f32 %v1976, %v1194
    %v1991 = vrot.slane %v1989, 2
    %1992 = vrot.lane.b32.xlu0 %v1991, 64
    %v1993 = vpop.permute.xlu0 %1992
    %v1995 = vmul.f32 %v1988, %v1993
    %1997 = vrot.lane.b32.xlu0 %v1995, 64
    %v1998 = vpop.permute.xlu0 %1997
    %v2000 = vadd.f32 %v1097, %v1998
    %v2001 = vtanh.pop %v2000
    %v2002 = vsub.f32 1.0, %v1988
    %2004 = vrot.lane.b32.xlu0 %v2001, 96
    %v2005 = vpop.permute.xlu0 %2004
    %v2007 = vmul.f32 %v2002, %v2005
    %v2008 = vrot.slane %v1897, 6
    %v2010 = vmul.f32 %v1988, %v2008
    %v2011 = vadd.f32 %v2007, %v2010
    %2013 = vrot.lane.b32.xlu0 %v2011, 96
    %v2014 = vpop.permute.xlu0 %2013
    %2016 = vst.msk [vmem:[#allocation2 + $0x1] sm:$0x40] %vm1566, %v2014
    %2017 = vst.msk [vmem:[#allocation2 + $0x8] sm:$0x80] %vm1568, %v2014
    %v2018 = vld [vmem:[#allocation2] sm:$0xff]
    %v2019 = vld [vmem:[#allocation2 + $0x8] sm:$0xff]
    %v2020 = vld [vmem:[%s10] sm:$0xff]
    %v2021 = vld [vmem:[%s10 + $0x8] sm:$0xff]
    %v2022 = vld [vmem:[%s10 + $0x10] sm:$0xff]
    %v2023 = vld [vmem:[%s10 + $0x18] sm:$0xff]
    %v2024 = vld [vmem:[%s11] sm:$0x1]
    %v2026 = vlaneseq
    %v2027 = vshrl.u32 %v2026, 7
    %v2028 = vsub.s32 0, %v2027
    %v2029 = vrot.slane %v2024, %v2028
    %v2032 = vsel %vm55, %v2018, 0
    %v2035 = vsel %vm55, %v2019, 0
    %2037 = vmatprep.subr.mxu0 0.0
    %2038 = vmatpush1.msra.mxu0 0.0
    %2039 = vmatprep.subr.mxu0 0.0
    %2040 = vmatpush1.msra.mxu0 0.0
    %2041 = vmatprep.subr.mxu0 0.0
    %2042 = vmatpush1.msra.mxu0 0.0
    %2043 = vmatprep.subr.mxu0 0.0
    %2044 = vmatpush1.msra.mxu0 0.0
    %2045 = vmatprep.subr.mxu0 0.0
    %2046 = vmatpush1.msra.mxu0 0.0
    %2047 = vmatprep.subr.mxu0 0.0
    %2048 = vmatpush1.msra.mxu0 0.0
    %2049 = vmatprep.subr.mxu0 0.0
    %2050 = vmatpush1.msra.mxu0 0.0
    %2051 = vmatprep.subr.mxu0 0.0
    %2052 = vmatpush1.msra.mxu0 0.0
    %2053 = vmatprep.subr.mxu0 0.0
    %2054 = vmatpush1.msra.mxu0 0.0
    %2055 = vmatprep.subr.mxu0 0.0
    %2056 = vmatpush1.msra.mxu0 0.0
    %2057 = vmatprep.subr.mxu0 0.0
    %2058 = vmatpush1.msra.mxu0 0.0
    %2059 = vmatprep.subr.mxu0 0.0
    %2060 = vmatpush1.msra.mxu0 0.0
    %2061 = vmatprep.subr.mxu0 0.0
    %2062 = vmatpush1.msra.mxu0 %v2023
    %2063 = vmatprep.subr.mxu0 0.0
    %2064 = vmatpush1.msra.mxu0 %v2022
    %2065 = vmatprep.subr.mxu0 0.0
    %2066 = vmatpush1.msra.mxu0 %v2021
    %2067 = vmatprep.subr.mxu0 0.0
    %2068 = vmatpush1.msra.mxu0 %v2020
    %2069 = vmatprep.subr.mxu0 0.0
    %2070 = vmatpush2.msra.mxu0 0.0
    %2071 = vmatprep.subr.mxu0 0.0
    %2072 = vmatpush2.msra.mxu0 0.0
    %2073 = vmatprep.subr.mxu0 0.0
    %2074 = vmatpush2.msra.mxu0 0.0
    %2075 = vmatprep.subr.mxu0 0.0
    %2076 = vmatpush2.msra.mxu0 0.0
    %2077 = vmatprep.subr.mxu0 0.0
    %2078 = vmatpush2.msra.mxu0 0.0
    %2079 = vmatprep.subr.mxu0 0.0
    %2080 = vmatpush2.msra.mxu0 0.0
    %2081 = vmatprep.subr.mxu0 0.0
    %2082 = vmatpush2.msra.mxu0 0.0
    %2083 = vmatprep.subr.mxu0 0.0
    %2084 = vmatpush2.msra.mxu0 0.0
    %2085 = vmatprep.subr.mxu0 0.0
    %2086 = vmatpush2.msra.mxu0 0.0
    %2087 = vmatprep.subr.mxu0 0.0
    %2088 = vmatpush2.msra.mxu0 0.0
    %2089 = vmatprep.subr.mxu0 0.0
    %2090 = vmatpush2.msra.mxu0 0.0
    %2091 = vmatprep.subr.mxu0 0.0
    %2092 = vmatpush2.msra.mxu0 0.0
    %2093 = vmatprep.subr.mxu0 0.0
    %2094 = vmatpush2.msra.mxu0 0.0
    %2095 = vmatprep.subr.mxu0 0.0
    %2096 = vmatpush2.msra.mxu0 0.0
    %2097 = vmatprep.subr.mxu0 0.0
    %2098 = vmatpush2.msra.mxu0 0.0
    %2099 = vmatprep.subr.mxu0 0.0
    %2100 = vmatpush2.msra.mxu0 0.0
    %2101 = vmatprep.mubr.f32.mxu0 0.0
    %2102 = vmatmul.mubr.f32.gmra.mxu0 %v2032
    %v2103 = vpop.f32.mrf.mxu0
    %v2104 = vadd.f32 %v2029, %v2103
    %v2105 = vpop.f32.mrf.mxu0
    %2106 = vmatprep.mubr.f32.mxu0 0.0
    %2107 = vmatmul.mubr.f32.gmra.mxu0 %v2035
    %v2108 = vpop.f32.mrf.mxu0
    %v2109 = vadd.f32 %v2029, %v2108
    %v2110 = vpop.f32.mrf.mxu0
    %2111 = vdwg.mxu0
    %vm2112 = vcmask 523264
    %v2113 = vsel %vm2112, %v2104, -inf
    %2114 = vmax.xlane.f32.xlu0 %v2113
    %v2115 = vpop.xlane.xlu0 %2114
    %v2116 = vsel %vm2112, %v2109, -inf
    %2117 = vmax.xlane.f32.xlu0 %v2116
    %v2118 = vpop.xlane.xlu0 %2117
    %v2119 = vsub.f32 %v2104, %v2115
    %v2120 = vsub.f32 %v2109, %v2118
    %v2121 = vmul.f32 %v2119, 1.442695
    %v2122 = vpow.pop %v2121
    %v2123 = vmul.f32 %v2120, 1.442695
    %v2124 = vpow.pop %v2123
    %v2125 = vsel %vm2112, %v2122, 0.0
    %2126 = vadd.xlane.f32.xlu0 %v2125
    %v2127 = vpop.xlane.xlu0 %2126
    %v2128 = vsel %vm2112, %v2124, 0.0
    %2129 = vadd.xlane.f32.xlu0 %v2128
    %v2130 = vpop.xlane.xlu0 %2129
    %v2131 = vrcp.pop %v2127
    %v2132 = vmul.f32 %v2122, %v2131
    %v2133 = vrcp.pop %v2130
    %v2134 = vmul.f32 %v2124, %v2133
    %2135 = vst.msk [vmem:[#allocation3] sm:$0xff] %vm2112, %v2132
    %2136 = vst.msk [vmem:[#allocation3 + $0x8] sm:$0xff] %vm2112, %v2134
    // Predicated region
    $region50: #{model_forward.1} parent=1 // pred_check
      _
    $region51: #{model_forward.1} parent=1 // pred_check_branch
      %2138 = sbr.rel (0) target = $region53
    $region52: #{model_forward.1} parent=1 // pred_region
      %s2140 = ssub.s32 256, 256
      %2141 = vsyncadd [#allocation4], %s2140
      %s2142 = sshll.u32 [#allocation3], 4
      %s2143 = int_to_ptr.vmem [resolvable:$true] %s2142
      %2148 = dma.vmem_to_hbm [thread:$0]  %s2143, 256, %s12, [#allocation4], 128, 128, 8
    $region53: #{model_forward.1} parent=1 // pred_fallthru
      _
    // Predicated region
    $region54: #{model_forward.1} parent=1 // pred_check
      _
    $region55: #{model_forward.1} parent=1 // pred_check_branch
      %2150 = sbr.rel (0) target = $region57
    $region56: #{model_forward.1} parent=1 // pred_region
      %2151 = dma.done [#allocation4], 256
    $region57: #{model_forward.1} parent=1 // pred_fallthru
      _
    %2152 = vsyncpa [#allocation4], 1

</llo_original>
